<compile_context>
chip_gen: v5e
topology: v5e:2x2
jax: 0.10.0
libtpu: 0.0.40
codegen_flags: <defaults>
</compile_context>

<pallas_src>
import math

import jax
import jax.numpy as jnp
import numpy as np
from jax.experimental import pallas as pl
from jax.experimental.pallas import tpu as pltpu

# ---- static problem constants (from the PyTorch module) ------------------------------
LIST_LEFT = [2, 5, 8, 11, 14, 17, 19, 21]
LIST_RIGHT = [3, 4, 7, 10, 13, 16, 18, 20]
LIST_UP = [13, 14, 16, 17, 18, 19, 20, 21]
LIST_DOWN = [1, 2, 4, 5, 7, 8, 10, 11]

T = 22                          # joints
D = 3                           # coords per joint == in_planes
H = D                           # hidden channels (hidden_size=1)
L = 8                           # joints per group -> conv length
K1 = 5                          # first conv kernel (Interactor default)
K2 = 3                          # second conv kernel (hard-coded)
PAD = (K1 - 1) // 2 + 1         # ReplicationPad1d((3, 3)) for odd kernel
L1 = L + 2 * PAD - (K1 - 1)     # 10: length after first conv
L2 = L1 - (K2 - 1)              # 8:  length after second conv (== L)
F = T * D                       # 66: rows of the full joint slab
DL = D * L                      # 24: rows of one group (coord-major, (d, l))
HL1 = H * L1                    # 30: rows of one first-conv output


# --------------------------------------------------------------------------- kernel
def scinet_kernel(x_ref, pe_ref, w1a_ref, b1a_ref, w2a_ref, b2a_ref, gsw_ref,
                  w1b_ref, b1b_ref, w2b_ref, b2b_ref, wdc_ref, wab_ref,
                  sc_ref, keep_ref, o_ref):
    """Fused SCINet_body forward for one batch block (batch on lanes).

    x_ref  : (F, B_BLK)        full joint slab, row = joint*D + coord
    pe_ref : (F, 1)            positional encoding column (broadcast over batch lanes)
    w1a    : (2, 2*HL1, F)     gather+pad+conv1 of (phi, psi), block-diagonal per pass
    b1a    : (2, 2*HL1, 1)
    w2a    : (2, 2*DL,  2*HL1) conv2 of (phi, psi)
    b2a    : (2, 2*DL,  1)
    gsw    : (2, 2*DL,  F)     gather of [x2; x1] (coord-major rows)
    w1b    : (2, 2*HL1, 2*DL)  pad+conv1 of (U, P) applied to dc = [d; c]
    b1b    : (2, 2*HL1, 1)
    w2b    : (2, 2*DL,  2*HL1) conv2 of (U, P)
    b2b    : (2, 2*DL,  1)
    wdc    : (2, 2*DL,  2*DL)  choose_{1,2} contribution from dc
    wab    : (2, 2*DL,  2*DL)  choose_{1,2} contribution from [U(d); P(c)]
    sc     : (2, F,     2*DL)  one-hot scatter of [y1; y2] back into the joint slab
    keep   : (2, F,     1)     1 outside the pass's joint groups, 0 inside
    o_ref  : (F, B_BLK)
    """
    f32 = jnp.float32
    X = x_ref[...] + pe_ref[...]                                     # PE add, fused in

    for i in range(2):                                               # interact_1, interact_2
        # first conv pair (phi on x1, psi on x2): gather+pad folded into the weights
        a1 = jnp.dot(w1a_ref[i], X, preferred_element_type=f32) + b1a_ref[i]
        a1 = jnp.maximum(a1, 0.01 * a1)                              # LeakyReLU(0.01)
        # TODO(synk): nn.Dropout(0.5) treated as identity (eval/inference semantics).
        a2 = jnp.tanh(jnp.dot(w2a_ref[i], a1, preferred_element_type=f32) + b2a_ref[i])
        # [x2; x1] gather (independent of the conv chain -> overlaps with it)
        x21 = jnp.dot(gsw_ref[i], X, preferred_element_type=f32)
        # dc = [d; c] = [x2*exp(phi(x1)); x1*exp(psi(x2))]; exp args bounded by tanh.
        dc = x21 * jnp.exp(a2)
        # second conv pair (U on d, P on c): pad folded into the weights
        a1b = jnp.dot(w1b_ref[i], dc, preferred_element_type=f32) + b1b_ref[i]
        a1b = jnp.maximum(a1b, 0.01 * a1b)
        a2b = jnp.tanh(jnp.dot(w2b_ref[i], a1b, preferred_element_type=f32) + b2b_ref[i])
        # choose_1/choose_2 (Linear biases zeroed in __init__): y = [y1; y2]
        y = (jnp.dot(wdc_ref[i], dc, preferred_element_type=f32)
             + jnp.dot(wab_ref[i], a2b, preferred_element_type=f32))
        # scatter back into the joint slab (groups are disjoint)
        X = X * keep_ref[i] + jnp.dot(sc_ref[i], y, preferred_element_type=f32)

    o_ref[...] = X


# --------------------------------------------------------------------------- wrapper
def _full_spec(arr):
    n = arr.ndim
    return pl.BlockSpec(arr.shape, lambda b, n=n: (0,) * n)


def position_encoding(max_length, input_dim):
    """Mirror of SCINet_body.get_position_encoding."""
    pe_hidden = input_dim + (input_dim % 2)
    num_ts = pe_hidden // 2
    log_inc = math.log(10000.0 / 1.0) / max(num_ts - 1, 1)
    inv_ts = jnp.exp(jnp.arange(num_ts, dtype=jnp.float32) * -log_inc)
    pos = jnp.arange(max_length, dtype=jnp.float32)
    scaled = pos[:, None] * inv_ts[None, :]
    signal = jnp.concatenate([jnp.sin(scaled), jnp.cos(scaled)], axis=1)   # (T, pe_hidden)
    return signal[None, :, :]                                              # (1, T, pe_hidden)


def scinet_body_forward(x, params, b_blk=128):
    """SCINet_body.forward with num_stacks=1, RIN=False, positionalE=True."""
    B = x.shape[0]
    assert x.shape[1:] == (T, D)

    pe = position_encoding(T, D)
    if pe.shape[2] > D:                       # static shape decision, as in the reference
        pe = pe[:, :, :-1]
    pe_col = pe[0].reshape(F, 1).astype(jnp.float32)                 # (66, 1)

    # Lane-dense layout: (F, B) slab, batch on lanes.  Pad batch up to a 128-multiple.
    n_blk = pl.cdiv(B, b_blk)
    Bp = n_blk * b_blk
    xf = jnp.transpose(x.reshape(B, F).astype(jnp.float32), (1, 0))  # (66, B)
    if Bp > B:
        xf = jnp.pad(xf, ((0, 0), (0, Bp - B)))

    weight_args = (pe_col, params["w1a"], params["b1a"], params["w2a"], params["b2a"],
                   params["gsw"], params["w1b"], params["b1b"], params["w2b"],
                   params["b2b"], params["wdc"], params["wab"], params["sc"],
                   params["keep"])

    data_spec = pl.BlockSpec((F, b_blk), lambda b: (0, b))
    out = pl.pallas_call(
        scinet_kernel,
        grid=(n_blk,),
        in_specs=[data_spec] + [_full_spec(a) for a in weight_args],
        out_specs=data_spec,
        out_shape=jax.ShapeDtypeStruct((F, Bp), jnp.float32),
        compiler_params=pltpu.CompilerParams(dimension_semantics=("parallel",)),
    )(xf, *weight_args)

    return jnp.transpose(out[:, :B], (1, 0)).reshape(B, T, D)


# --------------------------------------------------------------------------- params
def init_natural_params(key):
    """Random parameters in PyTorch layouts (Conv1d: (out,in,k); Linear: (out,in))."""
    def conv_stack(k):
        k1, k2, k3, k4 = jax.random.split(k, 4)
        return dict(
            w1=0.1 * jax.random.normal(k1, (H, D, K1), jnp.float32),
            b1=0.1 * jax.random.normal(k2, (H,), jnp.float32),
            w2=0.1 * jax.random.normal(k3, (D, H, K2), jnp.float32),
            b2=0.1 * jax.random.normal(k4, (D,), jnp.float32),
        )

    def interactor(k):
        ks = jax.random.split(k, 6)
        return dict(
            phi=conv_stack(ks[0]), psi=conv_stack(ks[1]),
            U=conv_stack(ks[2]), P=conv_stack(ks[3]),
            # nn.Linear biases are zeroed in SCINet_body.__init__
            wc1=0.1 * jax.random.normal(ks[4], (L, 2 * L), jnp.float32),
            wc2=0.1 * jax.random.normal(ks[5], (L, 2 * L), jnp.float32),
        )

    ka, kb = jax.random.split(key)
    return [interactor(ka), interactor(kb)]      # [interact_1, interact_2]


def _pad_src(j):
    """Replication-pad source position for padded index j (pad PAD on both sides)."""
    return min(max(j - PAD, 0), L - 1)


def _conv1_pair_from_full(stack_a, stack_b, list_a, list_b):
    """gather + ReplicationPad1d + first conv, block-diag pair, applied to the full slab."""
    W = np.zeros((2 * HL1, F), np.float32)
    bias = np.zeros((2 * HL1, 1), np.float32)
    for s, (stk, lst) in enumerate([(stack_a, list_a), (stack_b, list_b)]):
        w1, b1 = np.asarray(stk["w1"]), np.asarray(stk["b1"])
        for h in range(H):
            for lo in range(L1):
                row = s * HL1 + h * L1 + lo
                bias[row, 0] = b1[h]
                for d in range(D):
                    for k in range(K1):
                        col = lst[_pad_src(lo + k)] * D + d
                        W[row, col] += w1[h, d, k]
    return W, bias


def _conv1_pair_from_rows(stack_a, stack_b):
    """ReplicationPad1d + first conv, block-diag pair, applied to [u; v] in (d,l) row order."""
    W = np.zeros((2 * HL1, 2 * DL), np.float32)
    bias = np.zeros((2 * HL1, 1), np.float32)
    for s, stk in enumerate([stack_a, stack_b]):
        w1, b1 = np.asarray(stk["w1"]), np.asarray(stk["b1"])
        for h in range(H):
            for lo in range(L1):
                row = s * HL1 + h * L1 + lo
                bias[row, 0] = b1[h]
                for d in range(D):
                    for k in range(K1):
                        col = s * DL + d * L + _pad_src(lo + k)
                        W[row, col] += w1[h, d, k]
    return W, bias


def _conv2_pair(stack_a, stack_b):
    """Second conv (kernel 3), block-diag pair, rows ordered (stack, coord, position)."""
    W = np.zeros((2 * DL, 2 * HL1), np.float32)
    bias = np.zeros((2 * DL, 1), np.float32)
    for s, stk in enumerate([stack_a, stack_b]):
        w2, b2 = np.asarray(stk["w2"]), np.asarray(stk["b2"])
        for dout in range(D):
            for lo in range(L2):
                row = s * DL + dout * L2 + lo
                bias[row, 0] = b2[dout]
                for h in range(H):
                    for k in range(K2):
                        col = s * HL1 + h * L1 + (lo + k)
                        W[row, col] += w2[dout, h, k]
    return W, bias


def _gswap(list_a, list_b):
    """Gather [x2; x1] from the full slab, rows in (coord, position) order."""
    G = np.zeros((2 * DL, F), np.float32)
    for d in range(D):
        for l in range(L):
            G[d * L + l, list_b[l] * D + d] = 1.0           # x2 first (for d = x2*exp(phi(x1)))
            G[DL + d * L + l, list_a[l] * D + d] = 1.0      # x1 second (for c = x1*exp(psi(x2)))
    return G


def _choose_mats(wc1, wc2):
    """choose_1/choose_2 split into the dc=[d;c] and a2b=[U(d);P(c)] contributions."""
    wc1, wc2 = np.asarray(wc1), np.asarray(wc2)             # (L, 2L)
    Wdc = np.zeros((2 * DL, 2 * DL), np.float32)
    Wab = np.zeros((2 * DL, 2 * DL), np.float32)
    for d in range(D):
        for lo in range(L):
            r1 = d * L + lo                                  # y1 row
            r2 = DL + d * L + lo                             # y2 row
            for li in range(L):
                Wdc[r1, DL + d * L + li] = wc1[lo, li]       # c  (second half of dc)
                Wab[r1, d * L + li] = wc1[lo, L + li]        # U(d) (first half of a2b)
                Wdc[r2, d * L + li] = wc2[lo, li]            # d  (first half of dc)
                Wab[r2, DL + d * L + li] = wc2[lo, L + li]   # P(c) (second half of a2b)
    return Wdc, Wab


def _scatter_keep(list_a, list_b):
    S = np.zeros((F, 2 * DL), np.float32)
    keep = np.ones((F, 1), np.float32)
    for d in range(D):
        for l in range(L):
            S[list_a[l] * D + d, d * L + l] = 1.0
            S[list_b[l] * D + d, DL + d * L + l] = 1.0
            keep[list_a[l] * D + d, 0] = 0.0
            keep[list_b[l] * D + d, 0] = 0.0
    return S, keep


def pack_params(natural):
    groups = [(LIST_LEFT, LIST_RIGHT), (LIST_UP, LIST_DOWN)]
    keys = ("w1a", "b1a", "w2a", "b2a", "gsw", "w1b", "b1b", "w2b", "b2b",
            "wdc", "wab", "sc", "keep")
    acc = {k: [] for k in keys}
    for nat, (la, lb) in zip(natural, groups):
        w1a, b1a = _conv1_pair_from_full(nat["phi"], nat["psi"], la, lb)
        w2a, b2a = _conv2_pair(nat["phi"], nat["psi"])
        gsw = _gswap(la, lb)
        w1b, b1b = _conv1_pair_from_rows(nat["U"], nat["P"])
        w2b, b2b = _conv2_pair(nat["U"], nat["P"])
        wdc, wab = _choose_mats(nat["wc1"], nat["wc2"])
        sc, keep = _scatter_keep(la, lb)
        for k, v in zip(keys, (w1a, b1a, w2a, b2a, gsw, w1b, b1b, w2b, b2b,
                               wdc, wab, sc, keep)):
            acc[k].append(v)
    return {k: jnp.asarray(np.stack(v)) for k, v in acc.items()}


# --------------------------------------------------------------------------- reference
def _conv_stack_ref(x, s):
    # x: (D, L) channel-major; straightforward loop-form of the PyTorch conv stack.
    xp = jnp.concatenate([jnp.repeat(x[:, :1], PAD, axis=1), x,
                          jnp.repeat(x[:, -1:], PAD, axis=1)], axis=1)
    a = s["b1"][:, None] + sum(jnp.dot(s["w1"][:, :, k], xp[:, k:k + L1])
                               for k in range(K1))
    a = jnp.where(a > 0, a, 0.01 * a)
    o = s["b2"][:, None] + sum(jnp.dot(s["w2"][:, :, k], a[:, k:k + L2])
                               for k in range(K2))
    return jnp.tanh(o)


def _interactor_ref(x1, x2, nat):
    x1 = x1.T                                    # .permute(0, 2, 1)
    x2 = x2.T
    d = x2 * jnp.exp(_conv_stack_ref(x1, nat["phi"]))
    c = x1 * jnp.exp(_conv_stack_ref(x2, nat["psi"]))
    y1 = jnp.concatenate([c, _conv_stack_ref(d, nat["U"])], axis=-1) @ nat["wc1"].T
    y2 = jnp.concatenate([d, _conv_stack_ref(c, nat["P"])], axis=-1) @ nat["wc2"].T
    return y1.T, y2.T


def scinet_body_reference(x, natural):
    pe = position_encoding(T, D)
    if pe.shape[2] > D:
        pe = pe[:, :, :-1]
    x = x + pe
    for nat, (la, lb) in zip(natural, [(LIST_LEFT, LIST_RIGHT), (LIST_UP, LIST_DOWN)]):
        outs = [_interactor_ref(x[b, la, :], x[b, lb, :], nat) for b in range(x.shape[0])]
        x = x.at[:, la, :].set(jnp.stack([o[0] for o in outs]))
        x = x.at[:, lb, :].set(jnp.stack([o[1] for o in outs]))
    return x


# --------------------------------------------------------------------------- main
if __name__ == "__main__":
    key = jax.random.PRNGKey(0)
    kx, kp, kx2 = jax.random.split(key, 3)

    natural = init_natural_params(kp)
    params = pack_params(natural)
    fwd = jax.jit(scinet_body_forward)

    # Small batch: full numerical check against the pure-JAX reference.
    B = 2
    x = jax.random.normal(kx, (B, T, D), dtype=jnp.float32)
    out = jax.block_until_ready(fwd(x, params))
    assert out.shape == (B, T, D) and out.dtype == jnp.float32
    assert bool(jnp.all(jnp.isfinite(out)))
    ref = scinet_body_reference(x, natural)
    assert bool(jnp.allclose(out, ref, atol=1e-4, rtol=1e-4)), \
        float(jnp.max(jnp.abs(out - ref)))

    # Larger batch: exercises multiple 128-sample lane blocks + padded tail.
    B2 = 200
    x2 = jax.random.normal(kx2, (B2, T, D), dtype=jnp.float32)
    out2 = jax.block_until_ready(fwd(x2, params))
    assert out2.shape == (B2, T, D)
    assert bool(jnp.all(jnp.isfinite(out2)))
    assert bool(jnp.allclose(out2[:1], fwd(x2[:1], params), atol=1e-4, rtol=1e-4))

    print("KERNEL_OK")
</pallas_src>

<mosaic_0001>
module attributes {stable_mosaic.version = 11 : i64} {
  func.func @scinet_kernel(%arg0: i32, %arg1: memref<66x128xf32, #tpu.memory_space<vmem>>, %arg2: memref<66x1xf32, #tpu.memory_space<vmem>>, %arg3: memref<2x60x66xf32, #tpu.memory_space<vmem>>, %arg4: memref<2x60x1xf32, #tpu.memory_space<vmem>>, %arg5: memref<2x48x60xf32, #tpu.memory_space<vmem>>, %arg6: memref<2x48x1xf32, #tpu.memory_space<vmem>>, %arg7: memref<2x48x66xf32, #tpu.memory_space<vmem>>, %arg8: memref<2x60x48xf32, #tpu.memory_space<vmem>>, %arg9: memref<2x60x1xf32, #tpu.memory_space<vmem>>, %arg10: memref<2x48x60xf32, #tpu.memory_space<vmem>>, %arg11: memref<2x48x1xf32, #tpu.memory_space<vmem>>, %arg12: memref<2x48x48xf32, #tpu.memory_space<vmem>>, %arg13: memref<2x48x48xf32, #tpu.memory_space<vmem>>, %arg14: memref<2x66x48xf32, #tpu.memory_space<vmem>>, %arg15: memref<2x66x1xf32, #tpu.memory_space<vmem>>, %arg16: memref<66x128xf32, #tpu.memory_space<vmem>>) attributes {dimension_semantics = [#tpu.dimension_semantics<parallel>], iteration_bounds = array<i64: 1>, scalar_prefetch = 0 : i64, scratch_operands = 0 : i64, tpu.core_type = #tpu.core_type<tc>, window_params = [{transform_indices = @transform_0, window_bounds = array<i64: 66, 128>}, {pipeline_mode = #tpu.pipeline_mode<synchronous>, transform_indices = @transform_1, window_bounds = array<i64: 66, 1>}, {pipeline_mode = #tpu.pipeline_mode<synchronous>, transform_indices = @transform_2, window_bounds = array<i64: 2, 60, 66>}, {pipeline_mode = #tpu.pipeline_mode<synchronous>, transform_indices = @transform_3, window_bounds = array<i64: 2, 60, 1>}, {pipeline_mode = #tpu.pipeline_mode<synchronous>, transform_indices = @transform_4, window_bounds = array<i64: 2, 48, 60>}, {pipeline_mode = #tpu.pipeline_mode<synchronous>, transform_indices = @transform_5, window_bounds = array<i64: 2, 48, 1>}, {pipeline_mode = #tpu.pipeline_mode<synchronous>, transform_indices = @transform_6, window_bounds = array<i64: 2, 48, 66>}, {pipeline_mode = #tpu.pipeline_mode<synchronous>, transform_indices = @transform_7, window_bounds = array<i64: 2, 60, 48>}, {pipeline_mode = #tpu.pipeline_mode<synchronous>, transform_indices = @transform_8, window_bounds = array<i64: 2, 60, 1>}, {pipeline_mode = #tpu.pipeline_mode<synchronous>, transform_indices = @transform_9, window_bounds = array<i64: 2, 48, 60>}, {pipeline_mode = #tpu.pipeline_mode<synchronous>, transform_indices = @transform_10, window_bounds = array<i64: 2, 48, 1>}, {pipeline_mode = #tpu.pipeline_mode<synchronous>, transform_indices = @transform_11, window_bounds = array<i64: 2, 48, 48>}, {pipeline_mode = #tpu.pipeline_mode<synchronous>, transform_indices = @transform_12, window_bounds = array<i64: 2, 48, 48>}, {pipeline_mode = #tpu.pipeline_mode<synchronous>, transform_indices = @transform_13, window_bounds = array<i64: 2, 66, 48>}, {pipeline_mode = #tpu.pipeline_mode<synchronous>, transform_indices = @transform_14, window_bounds = array<i64: 2, 66, 1>}, {transform_indices = @transform_15, window_bounds = array<i64: 66, 128>}]} {
    %c0 = arith.constant 0 : index
    %c0_0 = arith.constant 0 : index
    %0 = vector.load %arg1[%c0, %c0_0] : memref<66x128xf32, #tpu.memory_space<vmem>>, vector<66x128xf32>
    %c0_1 = arith.constant 0 : index
    %c0_2 = arith.constant 0 : index
    %1 = vector.load %arg2[%c0_1, %c0_2] : memref<66x1xf32, #tpu.memory_space<vmem>>, vector<66x1xf32>
    %2 = vector.broadcast %1 : vector<66x1xf32> to vector<66x128xf32>
    %3 = arith.addf %0, %2 : vector<66x128xf32>
    %c0_3 = arith.constant 0 : index
    %c0_4 = arith.constant 0 : index
    %c0_5 = arith.constant 0 : index
    %4 = vector.load %arg3[%c0_3, %c0_4, %c0_5] : memref<2x60x66xf32, #tpu.memory_space<vmem>>, vector<1x60x66xf32>
    %5 = vector.shape_cast %4 : vector<1x60x66xf32> to vector<60x66xf32>
    %cst = arith.constant dense<0.000000e+00> : vector<60x128xf32>
    %6 = tpu.matmul %5, %3, %cst {dimension_numbers = #tpu.dot_dimension_numbers<[1], [0], [0], [1], [0, 0, 1, 1], [], []>} : vector<60x66xf32>, vector<66x128xf32>, vector<60x128xf32> -> vector<60x128xf32>
    %c0_6 = arith.constant 0 : index
    %c0_7 = arith.constant 0 : index
    %c0_8 = arith.constant 0 : index
    %7 = vector.load %arg4[%c0_6, %c0_7, %c0_8] : memref<2x60x1xf32, #tpu.memory_space<vmem>>, vector<1x60x1xf32>
    %8 = vector.shape_cast %7 : vector<1x60x1xf32> to vector<60x1xf32>
    %9 = vector.broadcast %8 : vector<60x1xf32> to vector<60x128xf32>
    %10 = arith.addf %6, %9 : vector<60x128xf32>
    %cst_9 = arith.constant 0.00999999977 : f32
    %11 = vector.broadcast %cst_9 : f32 to vector<60x128xf32>
    %12 = arith.mulf %11, %10 : vector<60x128xf32>
    %13 = arith.maximumf %10, %12 : vector<60x128xf32>
    %c0_10 = arith.constant 0 : index
    %c0_11 = arith.constant 0 : index
    %c0_12 = arith.constant 0 : index
    %14 = vector.load %arg5[%c0_10, %c0_11, %c0_12] : memref<2x48x60xf32, #tpu.memory_space<vmem>>, vector<1x48x60xf32>
    %15 = vector.shape_cast %14 : vector<1x48x60xf32> to vector<48x60xf32>
    %cst_13 = arith.constant dense<0.000000e+00> : vector<48x128xf32>
    %16 = tpu.matmul %15, %13, %cst_13 {dimension_numbers = #tpu.dot_dimension_numbers<[1], [0], [0], [1], [0, 0, 1, 1], [], []>} : vector<48x60xf32>, vector<60x128xf32>, vector<48x128xf32> -> vector<48x128xf32>
    %c0_14 = arith.constant 0 : index
    %c0_15 = arith.constant 0 : index
    %c0_16 = arith.constant 0 : index
    %17 = vector.load %arg6[%c0_14, %c0_15, %c0_16] : memref<2x48x1xf32, #tpu.memory_space<vmem>>, vector<1x48x1xf32>
    %18 = vector.shape_cast %17 : vector<1x48x1xf32> to vector<48x1xf32>
    %19 = vector.broadcast %18 : vector<48x1xf32> to vector<48x128xf32>
    %20 = arith.addf %16, %19 : vector<48x128xf32>
    %21 = math.tanh %20 : vector<48x128xf32>
    %c0_17 = arith.constant 0 : index
    %c0_18 = arith.constant 0 : index
    %c0_19 = arith.constant 0 : index
    %22 = vector.load %arg7[%c0_17, %c0_18, %c0_19] : memref<2x48x66xf32, #tpu.memory_space<vmem>>, vector<1x48x66xf32>
    %23 = vector.shape_cast %22 : vector<1x48x66xf32> to vector<48x66xf32>
    %cst_20 = arith.constant dense<0.000000e+00> : vector<48x128xf32>
    %24 = tpu.matmul %23, %3, %cst_20 {dimension_numbers = #tpu.dot_dimension_numbers<[1], [0], [0], [1], [0, 0, 1, 1], [], []>} : vector<48x66xf32>, vector<66x128xf32>, vector<48x128xf32> -> vector<48x128xf32>
    %25 = math.exp %21 : vector<48x128xf32>
    %26 = arith.mulf %24, %25 : vector<48x128xf32>
    %c0_21 = arith.constant 0 : index
    %c0_22 = arith.constant 0 : index
    %c0_23 = arith.constant 0 : index
    %27 = vector.load %arg8[%c0_21, %c0_22, %c0_23] : memref<2x60x48xf32, #tpu.memory_space<vmem>>, vector<1x60x48xf32>
    %28 = vector.shape_cast %27 : vector<1x60x48xf32> to vector<60x48xf32>
    %cst_24 = arith.constant dense<0.000000e+00> : vector<60x128xf32>
    %29 = tpu.matmul %28, %26, %cst_24 {dimension_numbers = #tpu.dot_dimension_numbers<[1], [0], [0], [1], [0, 0, 1, 1], [], []>} : vector<60x48xf32>, vector<48x128xf32>, vector<60x128xf32> -> vector<60x128xf32>
    %c0_25 = arith.constant 0 : index
    %c0_26 = arith.constant 0 : index
    %c0_27 = arith.constant 0 : index
    %30 = vector.load %arg9[%c0_25, %c0_26, %c0_27] : memref<2x60x1xf32, #tpu.memory_space<vmem>>, vector<1x60x1xf32>
    %31 = vector.shape_cast %30 : vector<1x60x1xf32> to vector<60x1xf32>
    %32 = vector.broadcast %31 : vector<60x1xf32> to vector<60x128xf32>
    %33 = arith.addf %29, %32 : vector<60x128xf32>
    %cst_28 = arith.constant 0.00999999977 : f32
    %34 = vector.broadcast %cst_28 : f32 to vector<60x128xf32>
    %35 = arith.mulf %34, %33 : vector<60x128xf32>
    %36 = arith.maximumf %33, %35 : vector<60x128xf32>
    %c0_29 = arith.constant 0 : index
    %c0_30 = arith.constant 0 : index
    %c0_31 = arith.constant 0 : index
    %37 = vector.load %arg10[%c0_29, %c0_30, %c0_31] : memref<2x48x60xf32, #tpu.memory_space<vmem>>, vector<1x48x60xf32>
    %38 = vector.shape_cast %37 : vector<1x48x60xf32> to vector<48x60xf32>
    %cst_32 = arith.constant dense<0.000000e+00> : vector<48x128xf32>
    %39 = tpu.matmul %38, %36, %cst_32 {dimension_numbers = #tpu.dot_dimension_numbers<[1], [0], [0], [1], [0, 0, 1, 1], [], []>} : vector<48x60xf32>, vector<60x128xf32>, vector<48x128xf32> -> vector<48x128xf32>
    %c0_33 = arith.constant 0 : index
    %c0_34 = arith.constant 0 : index
    %c0_35 = arith.constant 0 : index
    %40 = vector.load %arg11[%c0_33, %c0_34, %c0_35] : memref<2x48x1xf32, #tpu.memory_space<vmem>>, vector<1x48x1xf32>
    %41 = vector.shape_cast %40 : vector<1x48x1xf32> to vector<48x1xf32>
    %42 = vector.broadcast %41 : vector<48x1xf32> to vector<48x128xf32>
    %43 = arith.addf %39, %42 : vector<48x128xf32>
    %44 = math.tanh %43 : vector<48x128xf32>
    %c0_36 = arith.constant 0 : index
    %c0_37 = arith.constant 0 : index
    %c0_38 = arith.constant 0 : index
    %45 = vector.load %arg12[%c0_36, %c0_37, %c0_38] : memref<2x48x48xf32, #tpu.memory_space<vmem>>, vector<1x48x48xf32>
    %46 = vector.shape_cast %45 : vector<1x48x48xf32> to vector<48x48xf32>
    %cst_39 = arith.constant dense<0.000000e+00> : vector<48x128xf32>
    %47 = tpu.matmul %46, %26, %cst_39 {dimension_numbers = #tpu.dot_dimension_numbers<[1], [0], [0], [1], [0, 0, 1, 1], [], []>} : vector<48x48xf32>, vector<48x128xf32>, vector<48x128xf32> -> vector<48x128xf32>
    %c0_40 = arith.constant 0 : index
    %c0_41 = arith.constant 0 : index
    %c0_42 = arith.constant 0 : index
    %48 = vector.load %arg13[%c0_40, %c0_41, %c0_42] : memref<2x48x48xf32, #tpu.memory_space<vmem>>, vector<1x48x48xf32>
    %49 = vector.shape_cast %48 : vector<1x48x48xf32> to vector<48x48xf32>
    %cst_43 = arith.constant dense<0.000000e+00> : vector<48x128xf32>
    %50 = tpu.matmul %49, %44, %cst_43 {dimension_numbers = #tpu.dot_dimension_numbers<[1], [0], [0], [1], [0, 0, 1, 1], [], []>} : vector<48x48xf32>, vector<48x128xf32>, vector<48x128xf32> -> vector<48x128xf32>
    %51 = arith.addf %47, %50 : vector<48x128xf32>
    %c0_44 = arith.constant 0 : index
    %c0_45 = arith.constant 0 : index
    %c0_46 = arith.constant 0 : index
    %52 = vector.load %arg15[%c0_44, %c0_45, %c0_46] : memref<2x66x1xf32, #tpu.memory_space<vmem>>, vector<1x66x1xf32>
    %53 = vector.shape_cast %52 : vector<1x66x1xf32> to vector<66x1xf32>
    %54 = vector.broadcast %53 : vector<66x1xf32> to vector<66x128xf32>
    %55 = arith.mulf %3, %54 : vector<66x128xf32>
    %c0_47 = arith.constant 0 : index
    %c0_48 = arith.constant 0 : index
    %c0_49 = arith.constant 0 : index
    %56 = vector.load %arg14[%c0_47, %c0_48, %c0_49] : memref<2x66x48xf32, #tpu.memory_space<vmem>>, vector<1x66x48xf32>
    %57 = vector.shape_cast %56 : vector<1x66x48xf32> to vector<66x48xf32>
    %cst_50 = arith.constant dense<0.000000e+00> : vector<66x128xf32>
    %58 = tpu.matmul %57, %51, %cst_50 {dimension_numbers = #tpu.dot_dimension_numbers<[1], [0], [0], [1], [0, 0, 1, 1], [], []>} : vector<66x48xf32>, vector<48x128xf32>, vector<66x128xf32> -> vector<66x128xf32>
    %59 = arith.addf %55, %58 : vector<66x128xf32>
    %c1 = arith.constant 1 : index
    %c0_51 = arith.constant 0 : index
    %c0_52 = arith.constant 0 : index
    %60 = vector.load %arg3[%c1, %c0_51, %c0_52] : memref<2x60x66xf32, #tpu.memory_space<vmem>>, vector<1x60x66xf32>
    %61 = vector.shape_cast %60 : vector<1x60x66xf32> to vector<60x66xf32>
    %cst_53 = arith.constant dense<0.000000e+00> : vector<60x128xf32>
    %62 = tpu.matmul %61, %59, %cst_53 {dimension_numbers = #tpu.dot_dimension_numbers<[1], [0], [0], [1], [0, 0, 1, 1], [], []>} : vector<60x66xf32>, vector<66x128xf32>, vector<60x128xf32> -> vector<60x128xf32>
    %c1_54 = arith.constant 1 : index
    %c0_55 = arith.constant 0 : index
    %c0_56 = arith.constant 0 : index
    %63 = vector.load %arg4[%c1_54, %c0_55, %c0_56] : memref<2x60x1xf32, #tpu.memory_space<vmem>>, vector<1x60x1xf32>
    %64 = vector.shape_cast %63 : vector<1x60x1xf32> to vector<60x1xf32>
    %65 = vector.broadcast %64 : vector<60x1xf32> to vector<60x128xf32>
    %66 = arith.addf %62, %65 : vector<60x128xf32>
    %cst_57 = arith.constant 0.00999999977 : f32
    %67 = vector.broadcast %cst_57 : f32 to vector<60x128xf32>
    %68 = arith.mulf %67, %66 : vector<60x128xf32>
    %69 = arith.maximumf %66, %68 : vector<60x128xf32>
    %c1_58 = arith.constant 1 : index
    %c0_59 = arith.constant 0 : index
    %c0_60 = arith.constant 0 : index
    %70 = vector.load %arg5[%c1_58, %c0_59, %c0_60] : memref<2x48x60xf32, #tpu.memory_space<vmem>>, vector<1x48x60xf32>
    %71 = vector.shape_cast %70 : vector<1x48x60xf32> to vector<48x60xf32>
    %cst_61 = arith.constant dense<0.000000e+00> : vector<48x128xf32>
    %72 = tpu.matmul %71, %69, %cst_61 {dimension_numbers = #tpu.dot_dimension_numbers<[1], [0], [0], [1], [0, 0, 1, 1], [], []>} : vector<48x60xf32>, vector<60x128xf32>, vector<48x128xf32> -> vector<48x128xf32>
    %c1_62 = arith.constant 1 : index
    %c0_63 = arith.constant 0 : index
    %c0_64 = arith.constant 0 : index
    %73 = vector.load %arg6[%c1_62, %c0_63, %c0_64] : memref<2x48x1xf32, #tpu.memory_space<vmem>>, vector<1x48x1xf32>
    %74 = vector.shape_cast %73 : vector<1x48x1xf32> to vector<48x1xf32>
    %75 = vector.broadcast %74 : vector<48x1xf32> to vector<48x128xf32>
    %76 = arith.addf %72, %75 : vector<48x128xf32>
    %77 = math.tanh %76 : vector<48x128xf32>
    %c1_65 = arith.constant 1 : index
    %c0_66 = arith.constant 0 : index
    %c0_67 = arith.constant 0 : index
    %78 = vector.load %arg7[%c1_65, %c0_66, %c0_67] : memref<2x48x66xf32, #tpu.memory_space<vmem>>, vector<1x48x66xf32>
    %79 = vector.shape_cast %78 : vector<1x48x66xf32> to vector<48x66xf32>
    %cst_68 = arith.constant dense<0.000000e+00> : vector<48x128xf32>
    %80 = tpu.matmul %79, %59, %cst_68 {dimension_numbers = #tpu.dot_dimension_numbers<[1], [0], [0], [1], [0, 0, 1, 1], [], []>} : vector<48x66xf32>, vector<66x128xf32>, vector<48x128xf32> -> vector<48x128xf32>
    %81 = math.exp %77 : vector<48x128xf32>
    %82 = arith.mulf %80, %81 : vector<48x128xf32>
    %c1_69 = arith.constant 1 : index
    %c0_70 = arith.constant 0 : index
    %c0_71 = arith.constant 0 : index
    %83 = vector.load %arg8[%c1_69, %c0_70, %c0_71] : memref<2x60x48xf32, #tpu.memory_space<vmem>>, vector<1x60x48xf32>
    %84 = vector.shape_cast %83 : vector<1x60x48xf32> to vector<60x48xf32>
    %cst_72 = arith.constant dense<0.000000e+00> : vector<60x128xf32>
    %85 = tpu.matmul %84, %82, %cst_72 {dimension_numbers = #tpu.dot_dimension_numbers<[1], [0], [0], [1], [0, 0, 1, 1], [], []>} : vector<60x48xf32>, vector<48x128xf32>, vector<60x128xf32> -> vector<60x128xf32>
    %c1_73 = arith.constant 1 : index
    %c0_74 = arith.constant 0 : index
    %c0_75 = arith.constant 0 : index
    %86 = vector.load %arg9[%c1_73, %c0_74, %c0_75] : memref<2x60x1xf32, #tpu.memory_space<vmem>>, vector<1x60x1xf32>
    %87 = vector.shape_cast %86 : vector<1x60x1xf32> to vector<60x1xf32>
    %88 = vector.broadcast %87 : vector<60x1xf32> to vector<60x128xf32>
    %89 = arith.addf %85, %88 : vector<60x128xf32>
    %cst_76 = arith.constant 0.00999999977 : f32
    %90 = vector.broadcast %cst_76 : f32 to vector<60x128xf32>
    %91 = arith.mulf %90, %89 : vector<60x128xf32>
    %92 = arith.maximumf %89, %91 : vector<60x128xf32>
    %c1_77 = arith.constant 1 : index
    %c0_78 = arith.constant 0 : index
    %c0_79 = arith.constant 0 : index
    %93 = vector.load %arg10[%c1_77, %c0_78, %c0_79] : memref<2x48x60xf32, #tpu.memory_space<vmem>>, vector<1x48x60xf32>
    %94 = vector.shape_cast %93 : vector<1x48x60xf32> to vector<48x60xf32>
    %cst_80 = arith.constant dense<0.000000e+00> : vector<48x128xf32>
    %95 = tpu.matmul %94, %92, %cst_80 {dimension_numbers = #tpu.dot_dimension_numbers<[1], [0], [0], [1], [0, 0, 1, 1], [], []>} : vector<48x60xf32>, vector<60x128xf32>, vector<48x128xf32> -> vector<48x128xf32>
    %c1_81 = arith.constant 1 : index
    %c0_82 = arith.constant 0 : index
    %c0_83 = arith.constant 0 : index
    %96 = vector.load %arg11[%c1_81, %c0_82, %c0_83] : memref<2x48x1xf32, #tpu.memory_space<vmem>>, vector<1x48x1xf32>
    %97 = vector.shape_cast %96 : vector<1x48x1xf32> to vector<48x1xf32>
    %98 = vector.broadcast %97 : vector<48x1xf32> to vector<48x128xf32>
    %99 = arith.addf %95, %98 : vector<48x128xf32>
    %100 = math.tanh %99 : vector<48x128xf32>
    %c1_84 = arith.constant 1 : index
    %c0_85 = arith.constant 0 : index
    %c0_86 = arith.constant 0 : index
    %101 = vector.load %arg12[%c1_84, %c0_85, %c0_86] : memref<2x48x48xf32, #tpu.memory_space<vmem>>, vector<1x48x48xf32>
    %102 = vector.shape_cast %101 : vector<1x48x48xf32> to vector<48x48xf32>
    %cst_87 = arith.constant dense<0.000000e+00> : vector<48x128xf32>
    %103 = tpu.matmul %102, %82, %cst_87 {dimension_numbers = #tpu.dot_dimension_numbers<[1], [0], [0], [1], [0, 0, 1, 1], [], []>} : vector<48x48xf32>, vector<48x128xf32>, vector<48x128xf32> -> vector<48x128xf32>
    %c1_88 = arith.constant 1 : index
    %c0_89 = arith.constant 0 : index
    %c0_90 = arith.constant 0 : index
    %104 = vector.load %arg13[%c1_88, %c0_89, %c0_90] : memref<2x48x48xf32, #tpu.memory_space<vmem>>, vector<1x48x48xf32>
    %105 = vector.shape_cast %104 : vector<1x48x48xf32> to vector<48x48xf32>
    %cst_91 = arith.constant dense<0.000000e+00> : vector<48x128xf32>
    %106 = tpu.matmul %105, %100, %cst_91 {dimension_numbers = #tpu.dot_dimension_numbers<[1], [0], [0], [1], [0, 0, 1, 1], [], []>} : vector<48x48xf32>, vector<48x128xf32>, vector<48x128xf32> -> vector<48x128xf32>
    %107 = arith.addf %103, %106 : vector<48x128xf32>
    %c1_92 = arith.constant 1 : index
    %c0_93 = arith.constant 0 : index
    %c0_94 = arith.constant 0 : index
    %108 = vector.load %arg15[%c1_92, %c0_93, %c0_94] : memref<2x66x1xf32, #tpu.memory_space<vmem>>, vector<1x66x1xf32>
    %109 = vector.shape_cast %108 : vector<1x66x1xf32> to vector<66x1xf32>
    %110 = vector.broadcast %109 : vector<66x1xf32> to vector<66x128xf32>
    %111 = arith.mulf %59, %110 : vector<66x128xf32>
    %c1_95 = arith.constant 1 : index
    %c0_96 = arith.constant 0 : index
    %c0_97 = arith.constant 0 : index
    %112 = vector.load %arg14[%c1_95, %c0_96, %c0_97] : memref<2x66x48xf32, #tpu.memory_space<vmem>>, vector<1x66x48xf32>
    %113 = vector.shape_cast %112 : vector<1x66x48xf32> to vector<66x48xf32>
    %cst_98 = arith.constant dense<0.000000e+00> : vector<66x128xf32>
    %114 = tpu.matmul %113, %107, %cst_98 {dimension_numbers = #tpu.dot_dimension_numbers<[1], [0], [0], [1], [0, 0, 1, 1], [], []>} : vector<66x48xf32>, vector<48x128xf32>, vector<66x128xf32> -> vector<66x128xf32>
    %115 = arith.addf %111, %114 : vector<66x128xf32>
    %c0_99 = arith.constant 0 : index
    %c0_100 = arith.constant 0 : index
    %116 = vector.load %arg16[%c0_99, %c0_100] : memref<66x128xf32, #tpu.memory_space<vmem>>, vector<66x128xf32>
    tpu.vector_store %arg16[%c0_99, %c0_100], %115 {strides = array<i32>} : memref<66x128xf32, #tpu.memory_space<vmem>>, vector<66x128xf32>,
    return
  }
  func.func @transform_0(%arg0: i32) -> (i32, i32) {
    %c0_i32 = arith.constant 0 : i32
    %c0_i32_0 = arith.constant 0 : i32
    return %c0_i32, %arg0 : i32, i32
  }
  func.func @transform_1(%arg0: i32) -> (i32, i32) {
    %c0_i32 = arith.constant 0 : i32
    %c0_i32_0 = arith.constant 0 : i32
    %c0_i32_1 = arith.constant 0 : i32
    return %c0_i32, %c0_i32_0 : i32, i32
  }
  func.func @transform_2(%arg0: i32) -> (i32, i32, i32) {
    %c0_i32 = arith.constant 0 : i32
    %c0_i32_0 = arith.constant 0 : i32
    %c0_i32_1 = arith.constant 0 : i32
    %c0_i32_2 = arith.constant 0 : i32
    return %c0_i32, %c0_i32_0, %c0_i32_1 : i32, i32, i32
  }
  func.func @transform_3(%arg0: i32) -> (i32, i32, i32) {
    %c0_i32 = arith.constant 0 : i32
    %c0_i32_0 = arith.constant 0 : i32
    %c0_i32_1 = arith.constant 0 : i32
    %c0_i32_2 = arith.constant 0 : i32
    return %c0_i32, %c0_i32_0, %c0_i32_1 : i32, i32, i32
  }
  func.func @transform_4(%arg0: i32) -> (i32, i32, i32) {
    %c0_i32 = arith.constant 0 : i32
    %c0_i32_0 = arith.constant 0 : i32
    %c0_i32_1 = arith.constant 0 : i32
    %c0_i32_2 = arith.constant 0 : i32
    return %c0_i32, %c0_i32_0, %c0_i32_1 : i32, i32, i32
  }
  func.func @transform_5(%arg0: i32) -> (i32, i32, i32) {
    %c0_i32 = arith.constant 0 : i32
    %c0_i32_0 = arith.constant 0 : i32
    %c0_i32_1 = arith.constant 0 : i32
    %c0_i32_2 = arith.constant 0 : i32
    return %c0_i32, %c0_i32_0, %c0_i32_1 : i32, i32, i32
  }
  func.func @transform_6(%arg0: i32) -> (i32, i32, i32) {
    %c0_i32 = arith.constant 0 : i32
    %c0_i32_0 = arith.constant 0 : i32
    %c0_i32_1 = arith.constant 0 : i32
    %c0_i32_2 = arith.constant 0 : i32
    return %c0_i32, %c0_i32_0, %c0_i32_1 : i32, i32, i32
  }
  func.func @transform_7(%arg0: i32) -> (i32, i32, i32) {
    %c0_i32 = arith.constant 0 : i32
    %c0_i32_0 = arith.constant 0 : i32
    %c0_i32_1 = arith.constant 0 : i32
    %c0_i32_2 = arith.constant 0 : i32
    return %c0_i32, %c0_i32_0, %c0_i32_1 : i32, i32, i32
  }
  func.func @transform_8(%arg0: i32) -> (i32, i32, i32) {
    %c0_i32 = arith.constant 0 : i32
    %c0_i32_0 = arith.constant 0 : i32
    %c0_i32_1 = arith.constant 0 : i32
    %c0_i32_2 = arith.constant 0 : i32
    return %c0_i32, %c0_i32_0, %c0_i32_1 : i32, i32, i32
  }
  func.func @transform_9(%arg0: i32) -> (i32, i32, i32) {
    %c0_i32 = arith.constant 0 : i32
    %c0_i32_0 = arith.constant 0 : i32
    %c0_i32_1 = arith.constant 0 : i32
    %c0_i32_2 = arith.constant 0 : i32
    return %c0_i32, %c0_i32_0, %c0_i32_1 : i32, i32, i32
  }
  func.func @transform_10(%arg0: i32) -> (i32, i32, i32) {
    %c0_i32 = arith.constant 0 : i32
    %c0_i32_0 = arith.constant 0 : i32
    %c0_i32_1 = arith.constant 0 : i32
    %c0_i32_2 = arith.constant 0 : i32
    return %c0_i32, %c0_i32_0, %c0_i32_1 : i32, i32, i32
  }
  func.func @transform_11(%arg0: i32) -> (i32, i32, i32) {
    %c0_i32 = arith.constant 0 : i32
    %c0_i32_0 = arith.constant 0 : i32
    %c0_i32_1 = arith.constant 0 : i32
    %c0_i32_2 = arith.constant 0 : i32
    return %c0_i32, %c0_i32_0, %c0_i32_1 : i32, i32, i32
  }
  func.func @transform_12(%arg0: i32) -> (i32, i32, i32) {
    %c0_i32 = arith.constant 0 : i32
    %c0_i32_0 = arith.constant 0 : i32
    %c0_i32_1 = arith.constant 0 : i32
    %c0_i32_2 = arith.constant 0 : i32
    return %c0_i32, %c0_i32_0, %c0_i32_1 : i32, i32, i32
  }
  func.func @transform_13(%arg0: i32) -> (i32, i32, i32) {
    %c0_i32 = arith.constant 0 : i32
    %c0_i32_0 = arith.constant 0 : i32
    %c0_i32_1 = arith.constant 0 : i32
    %c0_i32_2 = arith.constant 0 : i32
    return %c0_i32, %c0_i32_0, %c0_i32_1 : i32, i32, i32
  }
  func.func @transform_14(%arg0: i32) -> (i32, i32, i32) {
    %c0_i32 = arith.constant 0 : i32
    %c0_i32_0 = arith.constant 0 : i32
    %c0_i32_1 = arith.constant 0 : i32
    %c0_i32_2 = arith.constant 0 : i32
    return %c0_i32, %c0_i32_0, %c0_i32_1 : i32, i32, i32
  }
  func.func @transform_15(%arg0: i32) -> (i32, i32) {
    %c0_i32 = arith.constant 0 : i32
    %c0_i32_0 = arith.constant 0 : i32
    return %c0_i32, %arg0 : i32, i32
  }
}

</mosaic_0001>

<llo_original>
// kernel: squeeze.0
$region0: #{squeeze.0}
  %s0 = inlined_call_operand.vmem [shape: f32[1,22,3], index: 0, kind: input, shape index: {}]
  %s1 = inlined_call_operand.vmem [shape: f32[66,1], index: 1, kind: output, shape index: {}]
  %v2 = vld [vmem:[%s0] sm:$0xff]
  %vm3 = vcmask 7168
  %4 = vst.msk [vmem:[%s1] ss:$3 sm:$0xff] %vm3, %v2
  %s5 = scalar_lea.vmem %s0, 8
  %v6 = vld [vmem:[%s5] sm:$0xff]
  %vm7 = vcmask 7168
  %s8 = scalar_lea.vmem %s1, 24
  %9 = vst.msk [vmem:[%s8] ss:$3 sm:$0xff] %vm7, %v6
  %s10 = scalar_lea.vmem %s0, 16
  %v11 = vld [vmem:[%s10] sm:$0x3f]
  %vm12 = vcmask 7168
  %s13 = scalar_lea.vmem %s1, 48
  %14 = vst.msk [vmem:[%s13] ss:$3 sm:$0x3f] %vm12, %v11
  %s15 = scalar_lea.vmem %s0, 21
  %s16 = smov 3
  %v17 = vld [vmem:[%s15] ss:$-21 sm:%s16]
  %s18 = scalar_lea.vmem %s0, 1
  %v19 = vld.sshfl [vmem:[%s18] sm:$0xff pattern:$0x2c1b0aaa]
  %vm20 = vcmask 1047554
  %v21 = vsel %vm20, %v19, %v17
  %22 = vrot.lane.b32.xlu0 %v21, 127
  %v23 = vpop.permute.xlu0 %22
  %vm24 = vcmask 7168
  %s25 = scalar_lea.vmem %s1, 64
  %26 = vst.msk [vmem:[%s25] ss:$-63 sm:$0x3] %vm24, %v23
  %s27 = scalar_lea.vmem %s1, 94
  %28 = vst.msk [vmem:[%s27] ss:$-30 sm:$0xc] %vm24, %v23
  %s29 = scalar_lea.vmem %s1, 157
  %30 = vst.msk [vmem:[%s29] ss:$-30 sm:$0x30] %vm24, %v23
  %s31 = scalar_lea.vmem %s1, 220
  %32 = vst.msk [vmem:[%s31] ss:$-30 sm:$0xc0] %vm24, %v23
  %s33 = scalar_lea.vmem %s0, 4
  %v34 = vld.sshfl [vmem:[%s33] sm:$0xff pattern:$0x3d2c1b0a]
  %35 = vrot.lane.b32.xlu0 %v34, 127
  %v36 = vpop.permute.xlu0 %35
  %vm37 = vcmask 7168
  %s38 = scalar_lea.vmem %s1, 43
  %39 = vst.msk [vmem:[%s38] ss:$-30 sm:$0x3] %vm37, %v36
  %s40 = scalar_lea.vmem %s1, 106
  %41 = vst.msk [vmem:[%s40] ss:$-30 sm:$0xc] %vm37, %v36
  %s42 = scalar_lea.vmem %s1, 169
  %43 = vst.msk [vmem:[%s42] ss:$-30 sm:$0x30] %vm37, %v36
  %s44 = scalar_lea.vmem %s1, 232
  %45 = vst.msk [vmem:[%s44] ss:$-30 sm:$0xc0] %vm37, %v36
  %s46 = scalar_lea.vmem %s0, 8
  %v47 = vld.sshfl [vmem:[%s46] sm:$0xff pattern:$0x222c1b0a]
  %48 = vrot.lane.b32.xlu0 %v47, 127
  %v49 = vpop.permute.xlu0 %48
  %vm50 = vcmask 7168
  %s51 = scalar_lea.vmem %s1, 55
  %52 = vst.msk [vmem:[%s51] ss:$-30 sm:$0x3] %vm50, %v49
  %s53 = scalar_lea.vmem %s1, 118
  %54 = vst.msk [vmem:[%s53] ss:$-30 sm:$0xc] %vm50, %v49
  %s55 = scalar_lea.vmem %s1, 181
  %56 = vst.msk [vmem:[%s55] ss:$-30 sm:$0x30] %vm50, %v49
  %s57 = scalar_lea.vmem %s0, 10
  %s58 = smov 3
  %v59 = vld [vmem:[%s57] ss:$11 sm:%s58]
  %v60 = vld.sshfl [vmem:[%s0] sm:$0xff pattern:$0xd2c1b000]
  %vm61 = vcmask 1047554
  %v62 = vsel %vm61, %v60, %v59
  %63 = vrot.lane.b32.xlu0 %v62, 126
  %v64 = vpop.permute.xlu0 %63
  %vm65 = vcmask 7168
  %s66 = scalar_lea.vmem %s1, 32
  %67 = vst.msk [vmem:[%s66] ss:$33 sm:$0x3] %vm65, %v64
  %s68 = scalar_lea.vmem %s1, 4294967232
  %69 = vst.msk [vmem:[%s68] ss:$33 sm:$0xc] %vm65, %v64
  %s70 = scalar_lea.vmem %s1, 4294967169
  %71 = vst.msk [vmem:[%s70] ss:$33 sm:$0x30] %vm65, %v64
  %s72 = scalar_lea.vmem %s1, 4294967106
  %73 = vst.msk [vmem:[%s72] ss:$33 sm:$0xc0] %vm65, %v64
  %s74 = scalar_lea.vmem %s0, 3
  %v75 = vld.sshfl [vmem:[%s74] sm:$0xff pattern:$0xe3d2c1b0]
  %76 = vrot.lane.b32.xlu0 %v75, 126
  %v77 = vpop.permute.xlu0 %76
  %vm78 = vcmask 7168
  %s79 = scalar_lea.vmem %s1, 11
  %80 = vst.msk [vmem:[%s79] ss:$33 sm:$0x3] %vm78, %v77
  %s81 = scalar_lea.vmem %s1, 4294967244
  %82 = vst.msk [vmem:[%s81] ss:$33 sm:$0xc] %vm78, %v77
  %s83 = scalar_lea.vmem %s1, 4294967181
  %84 = vst.msk [vmem:[%s83] ss:$33 sm:$0x30] %vm78, %v77
  %s85 = scalar_lea.vmem %s1, 4294967118
  %86 = vst.msk [vmem:[%s85] ss:$33 sm:$0xc0] %vm78, %v77
  %s87 = scalar_lea.vmem %s0, 7
  %v88 = vld.sshfl [vmem:[%s87] sm:$0xff pattern:$0xddd2c1b0]
  %89 = vrot.lane.b32.xlu0 %v88, 126
  %v90 = vpop.permute.xlu0 %89
  %vm91 = vcmask 7168
  %s92 = scalar_lea.vmem %s1, 23
  %93 = vst.msk [vmem:[%s92] ss:$33 sm:$0x3] %vm91, %v90
  %s94 = scalar_lea.vmem %s1, 4294967256
  %95 = vst.msk [vmem:[%s94] ss:$33 sm:$0xc] %vm91, %v90
  %s96 = scalar_lea.vmem %s1, 4294967193
  %97 = vst.msk [vmem:[%s96] ss:$33 sm:$0x30] %vm91, %v90

// kernel: scinet_body_forward.1
$region0: #{scinet_body_forward.1}
  #allocation0 [shape = 'u32[]', space=smem, size = 0x4, offset = 0x4, fixed_abs, tag = 'smem constant byte address 0x4 - core index']
  #allocation1 [shape = 'u32[72,128]{1,0:T(1,128)}', space=vmem, size = 0x9000, scoped, tag = 'internal scratch']
  %s0 = inlined_call_operand.vmem [shape: f32[66,128], index: 0, kind: input, shape index: {}]
  %s1 = inlined_call_operand.vmem [shape: f32[66,1], index: 1, kind: input, shape index: {}]
  %s2 = inlined_call_operand.vmem [shape: f32[2,60,66], index: 2, kind: input, shape index: {}]
  %s3 = inlined_call_operand.vmem [shape: f32[2,60,1], index: 3, kind: input, shape index: {}]
  %s4 = inlined_call_operand.vmem [shape: f32[2,48,60], index: 4, kind: input, shape index: {}]
  %s5 = inlined_call_operand.vmem [shape: f32[2,48,1], index: 5, kind: input, shape index: {}]
  %s6 = inlined_call_operand.vmem [shape: f32[2,48,66], index: 6, kind: input, shape index: {}]
  %s7 = inlined_call_operand.vmem [shape: f32[2,60,48], index: 7, kind: input, shape index: {}]
  %s8 = inlined_call_operand.vmem [shape: f32[2,60,1], index: 8, kind: input, shape index: {}]
  %s9 = inlined_call_operand.vmem [shape: f32[2,48,60], index: 9, kind: input, shape index: {}]
  %s10 = inlined_call_operand.vmem [shape: f32[2,48,1], index: 10, kind: input, shape index: {}]
  %s11 = inlined_call_operand.vmem [shape: f32[2,48,48], index: 11, kind: input, shape index: {}]
  %s12 = inlined_call_operand.vmem [shape: f32[2,48,48], index: 12, kind: input, shape index: {}]
  %s13 = inlined_call_operand.vmem [shape: f32[2,66,48], index: 13, kind: input, shape index: {}]
  %s14 = inlined_call_operand.vmem [shape: f32[2,66,1], index: 14, kind: input, shape index: {}]
  %s15 = inlined_call_operand.vmem [shape: f32[66,128], index: 15, kind: output, shape index: {}]
  %s16 = sld [smem:[#allocation0]]
  $region70: #{scinet_body_forward.1} parent=0
    _
  %s18 = ssub.s32 1, %s16
  %s19 = scalar_select 0, %s18, %s16
  // Predicated region
  $region2: #{scinet_body_forward.1} parent=0 // pred_check
    _
  $region3: #{scinet_body_forward.1} parent=0 // pred_check_branch
    %21 = sbr.rel (0) target = $region5
  $region4: #{scinet_body_forward.1} parent=0 // pred_region
    _
  $region5: #{scinet_body_forward.1} parent=0 // pred_fallthru
    _
  // Predicated region
  $region6: #{scinet_body_forward.1} parent=0 // pred_check
    _
  $region7: #{scinet_body_forward.1} parent=0 // pred_check_branch
    %23 = sbr.rel (0) target = $region9
  $region8: #{scinet_body_forward.1} parent=0 // pred_region
    _
  $region9: #{scinet_body_forward.1} parent=0 // pred_fallthru
    _
  // Predicated region
  $region10: #{scinet_body_forward.1} parent=0 // pred_check
    _
  $region11: #{scinet_body_forward.1} parent=0 // pred_check_branch
    %25 = sbr.rel (0) target = $region13
  $region12: #{scinet_body_forward.1} parent=0 // pred_region
    _
  $region13: #{scinet_body_forward.1} parent=0 // pred_fallthru
    _
  // Predicated region
  $region14: #{scinet_body_forward.1} parent=0 // pred_check
    _
  $region15: #{scinet_body_forward.1} parent=0 // pred_check_branch
    %27 = sbr.rel (0) target = $region17
  $region16: #{scinet_body_forward.1} parent=0 // pred_region
    _
  $region17: #{scinet_body_forward.1} parent=0 // pred_fallthru
    _
  // Predicated region
  $region18: #{scinet_body_forward.1} parent=0 // pred_check
    _
  $region19: #{scinet_body_forward.1} parent=0 // pred_check_branch
    %29 = sbr.rel (0) target = $region21
  $region20: #{scinet_body_forward.1} parent=0 // pred_region
    _
  $region21: #{scinet_body_forward.1} parent=0 // pred_fallthru
    _
  // Predicated region
  $region22: #{scinet_body_forward.1} parent=0 // pred_check
    _
  $region23: #{scinet_body_forward.1} parent=0 // pred_check_branch
    %31 = sbr.rel (0) target = $region25
  $region24: #{scinet_body_forward.1} parent=0 // pred_region
    _
  $region25: #{scinet_body_forward.1} parent=0 // pred_fallthru
    _
  // Predicated region
  $region26: #{scinet_body_forward.1} parent=0 // pred_check
    _
  $region27: #{scinet_body_forward.1} parent=0 // pred_check_branch
    %33 = sbr.rel (0) target = $region29
  $region28: #{scinet_body_forward.1} parent=0 // pred_region
    _
  $region29: #{scinet_body_forward.1} parent=0 // pred_fallthru
    _
  // Predicated region
  $region30: #{scinet_body_forward.1} parent=0 // pred_check
    _
  $region31: #{scinet_body_forward.1} parent=0 // pred_check_branch
    %35 = sbr.rel (0) target = $region33
  $region32: #{scinet_body_forward.1} parent=0 // pred_region
    _
  $region33: #{scinet_body_forward.1} parent=0 // pred_fallthru
    _
  // Predicated region
  $region34: #{scinet_body_forward.1} parent=0 // pred_check
    _
  $region35: #{scinet_body_forward.1} parent=0 // pred_check_branch
    %37 = sbr.rel (0) target = $region37
  $region36: #{scinet_body_forward.1} parent=0 // pred_region
    _
  $region37: #{scinet_body_forward.1} parent=0 // pred_fallthru
    _
  // Predicated region
  $region38: #{scinet_body_forward.1} parent=0 // pred_check
    _
  $region39: #{scinet_body_forward.1} parent=0 // pred_check_branch
    %39 = sbr.rel (0) target = $region41
  $region40: #{scinet_body_forward.1} parent=0 // pred_region
    _
  $region41: #{scinet_body_forward.1} parent=0 // pred_fallthru
    _
  // Predicated region
  $region42: #{scinet_body_forward.1} parent=0 // pred_check
    _
  $region43: #{scinet_body_forward.1} parent=0 // pred_check_branch
    %41 = sbr.rel (0) target = $region45
  $region44: #{scinet_body_forward.1} parent=0 // pred_region
    _
  $region45: #{scinet_body_forward.1} parent=0 // pred_fallthru
    _
  // Predicated region
  $region46: #{scinet_body_forward.1} parent=0 // pred_check
    _
  $region47: #{scinet_body_forward.1} parent=0 // pred_check_branch
    %43 = sbr.rel (0) target = $region49
  $region48: #{scinet_body_forward.1} parent=0 // pred_region
    _
  $region49: #{scinet_body_forward.1} parent=0 // pred_fallthru
    _
  // Predicated region
  $region50: #{scinet_body_forward.1} parent=0 // pred_check
    _
  $region51: #{scinet_body_forward.1} parent=0 // pred_check_branch
    %45 = sbr.rel (0) target = $region53
  $region52: #{scinet_body_forward.1} parent=0 // pred_region
    _
  $region53: #{scinet_body_forward.1} parent=0 // pred_fallthru
    _
  // Predicated region
  $region54: #{scinet_body_forward.1} parent=0 // pred_check
    _
  $region55: #{scinet_body_forward.1} parent=0 // pred_check_branch
    %47 = sbr.rel (0) target = $region57
  $region56: #{scinet_body_forward.1} parent=0 // pred_region
    _
  $region57: #{scinet_body_forward.1} parent=0 // pred_fallthru
    _
  // Predicated region
  $region58: #{scinet_body_forward.1} parent=0 // pred_check
    _
  $region59: #{scinet_body_forward.1} parent=0 // pred_check_branch
    %49 = sbr.rel (0) target = $region61
  $region60: #{scinet_body_forward.1} parent=0 // pred_region
    _
  $region61: #{scinet_body_forward.1} parent=0 // pred_fallthru
    _
  %v50 = vld [vmem:[%s0] sm:$0xff]
  %v51 = vld [vmem:[%s0 + $0x8] sm:$0xff]
  %v52 = vld [vmem:[%s0 + $0x10] sm:$0xff]
  %v53 = vld [vmem:[%s0 + $0x18] sm:$0xff]
  %v54 = vld [vmem:[%s0 + $0x20] sm:$0xff]
  %v55 = vld [vmem:[%s0 + $0x28] sm:$0xff]
  %v56 = vld [vmem:[%s0 + $0x30] sm:$0xff]
  %v57 = vld [vmem:[%s0 + $0x38] sm:$0xff]
  %v58 = vld [vmem:[%s0 + $0x40] sm:$0x3]
  %v59 = vld [vmem:[%s1] sm:$0xff]
  %v60 = vld [vmem:[%s1 + $0x8] sm:$0xff]
  %v61 = vld [vmem:[%s1 + $0x10] sm:$0xff]
  %v62 = vld [vmem:[%s1 + $0x18] sm:$0xff]
  %v63 = vld [vmem:[%s1 + $0x20] sm:$0xff]
  %v64 = vld [vmem:[%s1 + $0x28] sm:$0xff]
  %v65 = vld [vmem:[%s1 + $0x30] sm:$0xff]
  %v66 = vld [vmem:[%s1 + $0x38] sm:$0xff]
  %v67 = vld [vmem:[%s1 + $0x40] sm:$0x3]
  %69 = vset.pattern.permute.xlu0 0
  %70 = vperm.xlu0 %69, %v59
  %v71 = vpop.permute.xlu0 %70
  %74 = vset.pattern.permute.xlu0 0
  %75 = vperm.xlu0 %74, %v60
  %v76 = vpop.permute.xlu0 %75
  %79 = vset.pattern.permute.xlu0 0
  %80 = vperm.xlu0 %79, %v61
  %v81 = vpop.permute.xlu0 %80
  %84 = vset.pattern.permute.xlu0 0
  %85 = vperm.xlu0 %84, %v62
  %v86 = vpop.permute.xlu0 %85
  %89 = vset.pattern.permute.xlu0 0
  %90 = vperm.xlu0 %89, %v63
  %v91 = vpop.permute.xlu0 %90
  %94 = vset.pattern.permute.xlu0 0
  %95 = vperm.xlu0 %94, %v64
  %v96 = vpop.permute.xlu0 %95
  %99 = vset.pattern.permute.xlu0 0
  %100 = vperm.xlu0 %99, %v65
  %v101 = vpop.permute.xlu0 %100
  %104 = vset.pattern.permute.xlu0 0
  %105 = vperm.xlu0 %104, %v66
  %v106 = vpop.permute.xlu0 %105
  %109 = vset.pattern.permute.xlu0 0
  %110 = vperm.xlu0 %109, %v67
  %v111 = vpop.permute.xlu0 %110
  %v113 = vadd.f32 %v50, %v71
  %v114 = vadd.f32 %v51, %v76
  %v115 = vadd.f32 %v52, %v81
  %v116 = vadd.f32 %v53, %v86
  %v117 = vadd.f32 %v54, %v91
  %v118 = vadd.f32 %v55, %v96
  %v119 = vadd.f32 %v56, %v101
  %v120 = vadd.f32 %v57, %v106
  %v121 = vadd.f32 %v58, %v111
  %v122 = vld [vmem:[%s2] sm:$0xff]
  %v123 = vld [vmem:[%s2 + $0x8] sm:$0xff]
  %v124 = vld [vmem:[%s2 + $0x10] sm:$0xff]
  %v125 = vld [vmem:[%s2 + $0x18] sm:$0xff]
  %v126 = vld [vmem:[%s2 + $0x20] sm:$0xff]
  %v127 = vld [vmem:[%s2 + $0x28] sm:$0xff]
  %v128 = vld [vmem:[%s2 + $0x30] sm:$0xff]
  %v129 = vld [vmem:[%s2 + $0x38] sm:$0xf]
  %v130 = vld [vmem:[%s3] sm:$0xff]
  %v131 = vld [vmem:[%s3 + $0x8] sm:$0xff]
  %v132 = vld [vmem:[%s3 + $0x10] sm:$0xff]
  %v133 = vld [vmem:[%s3 + $0x18] sm:$0xff]
  %v134 = vld [vmem:[%s3 + $0x20] sm:$0xff]
  %v135 = vld [vmem:[%s3 + $0x28] sm:$0xff]
  %v136 = vld [vmem:[%s3 + $0x30] sm:$0xff]
  %v137 = vld [vmem:[%s3 + $0x38] sm:$0xf]
  %139 = vset.pattern.permute.xlu0 0
  %140 = vperm.xlu0 %139, %v130
  %v141 = vpop.permute.xlu0 %140
  %144 = vset.pattern.permute.xlu0 0
  %145 = vperm.xlu0 %144, %v131
  %v146 = vpop.permute.xlu0 %145
  %149 = vset.pattern.permute.xlu0 0
  %150 = vperm.xlu0 %149, %v132
  %v151 = vpop.permute.xlu0 %150
  %154 = vset.pattern.permute.xlu0 0
  %155 = vperm.xlu0 %154, %v133
  %v156 = vpop.permute.xlu0 %155
  %159 = vset.pattern.permute.xlu0 0
  %160 = vperm.xlu0 %159, %v134
  %v161 = vpop.permute.xlu0 %160
  %164 = vset.pattern.permute.xlu0 0
  %165 = vperm.xlu0 %164, %v135
  %v166 = vpop.permute.xlu0 %165
  %169 = vset.pattern.permute.xlu0 0
  %170 = vperm.xlu0 %169, %v136
  %v171 = vpop.permute.xlu0 %170
  %174 = vset.pattern.permute.xlu0 0
  %175 = vperm.xlu0 %174, %v137
  %v176 = vpop.permute.xlu0 %175
  %vm178 = vcmask 539648
  %v180 = vsel %vm178, %v122, 0
  %v183 = vsel %vm178, %v123, 0
  %v186 = vsel %vm178, %v124, 0
  %v189 = vsel %vm178, %v125, 0
  %v192 = vsel %vm178, %v126, 0
  %v195 = vsel %vm178, %v127, 0
  %v198 = vsel %vm178, %v128, 0
  %v201 = vsel %vm178, %v129, 0
  %vm203 = vcmask 1041408
  %v205 = vsel %vm203, %v121, 0
  %207 = vmatpush.msra.mxu0 0.0
  %208 = vmatpush.msra.mxu0 0.0
  %209 = vmatpush.msra.mxu0 0.0
  %210 = vmatpush.msra.mxu0 0.0
  %211 = vmatpush.msra.mxu0 0.0
  %212 = vmatpush.msra.mxu0 0.0
  %213 = vmatpush.msra.mxu0 0.0
  %214 = vmatpush.msra.mxu0 %v205
  %215 = vmatpush.msra.mxu0 %v120
  %216 = vmatpush.msra.mxu0 %v119
  %217 = vmatpush.msra.mxu0 %v118
  %218 = vmatpush.msra.mxu0 %v117
  %219 = vmatpush.msra.mxu0 %v116
  %220 = vmatpush.msra.mxu0 %v115
  %221 = vmatpush.msra.mxu0 %v114
  %222 = vmatpush.msra.mxu0 %v113
  %223 = vmatmul.f32.gmra.mxu0 %v180
  %v224 = vpop.f32.mrf.mxu0
  %v225 = vadd.f32 %v141, %v224
  %226 = vmatmul.f32.gmra.mxu0 %v183
  %v227 = vpop.f32.mrf.mxu0
  %v228 = vadd.f32 %v146, %v227
  %229 = vmatmul.f32.gmra.mxu0 %v186
  %v230 = vpop.f32.mrf.mxu0
  %v231 = vadd.f32 %v151, %v230
  %232 = vmatmul.f32.gmra.mxu0 %v189
  %v233 = vpop.f32.mrf.mxu0
  %v234 = vadd.f32 %v156, %v233
  %235 = vmatmul.f32.gmra.mxu0 %v192
  %v236 = vpop.f32.mrf.mxu0
  %v237 = vadd.f32 %v161, %v236
  %238 = vmatmul.f32.gmra.mxu0 %v195
  %v239 = vpop.f32.mrf.mxu0
  %v240 = vadd.f32 %v166, %v239
  %241 = vmatmul.f32.gmra.mxu0 %v198
  %v242 = vpop.f32.mrf.mxu0
  %v243 = vadd.f32 %v171, %v242
  %244 = vmatmul.f32.gmra.mxu0 %v201
  %v245 = vpop.f32.mrf.mxu0
  %v246 = vadd.f32 %v176, %v245
  %247 = vdwg.mxu0
  %v248 = vmul.f32 %v225, 0.01
  %v249 = vmul.f32 %v228, 0.01
  %v250 = vmul.f32 %v231, 0.01
  %v251 = vmul.f32 %v234, 0.01
  %v252 = vmul.f32 %v237, 0.01
  %v253 = vmul.f32 %v240, 0.01
  %v254 = vmul.f32 %v243, 0.01
  %v255 = vmul.f32 %v246, 0.01
  %v256 = vmax.f32 %v225, %v248
  %v257 = vmax.f32 %v228, %v249
  %v258 = vmax.f32 %v231, %v250
  %v259 = vmax.f32 %v234, %v251
  %v260 = vmax.f32 %v237, %v252
  %v261 = vmax.f32 %v240, %v253
  %v262 = vmax.f32 %v243, %v254
  %v263 = vmax.f32 %v246, %v255
  %v264 = vld [vmem:[%s4] sm:$0xff]
  %v265 = vld [vmem:[%s4 + $0x8] sm:$0xff]
  %v266 = vld [vmem:[%s4 + $0x10] sm:$0xff]
  %v267 = vld [vmem:[%s4 + $0x18] sm:$0xff]
  %v268 = vld [vmem:[%s4 + $0x20] sm:$0xff]
  %v269 = vld [vmem:[%s4 + $0x28] sm:$0xff]
  %v270 = vld [vmem:[%s5] sm:$0xff]
  %v271 = vld [vmem:[%s5 + $0x8] sm:$0xff]
  %v272 = vld [vmem:[%s5 + $0x10] sm:$0xff]
  %v273 = vld [vmem:[%s5 + $0x18] sm:$0xff]
  %v274 = vld [vmem:[%s5 + $0x20] sm:$0xff]
  %v275 = vld [vmem:[%s5 + $0x28] sm:$0xff]
  %277 = vset.pattern.permute.xlu0 0
  %278 = vperm.xlu0 %277, %v270
  %v279 = vpop.permute.xlu0 %278
  %282 = vset.pattern.permute.xlu0 0
  %283 = vperm.xlu0 %282, %v271
  %v284 = vpop.permute.xlu0 %283
  %287 = vset.pattern.permute.xlu0 0
  %288 = vperm.xlu0 %287, %v272
  %v289 = vpop.permute.xlu0 %288
  %292 = vset.pattern.permute.xlu0 0
  %293 = vperm.xlu0 %292, %v273
  %v294 = vpop.permute.xlu0 %293
  %297 = vset.pattern.permute.xlu0 0
  %298 = vperm.xlu0 %297, %v274
  %v299 = vpop.permute.xlu0 %298
  %302 = vset.pattern.permute.xlu0 0
  %303 = vperm.xlu0 %302, %v275
  %v304 = vpop.permute.xlu0 %303
  %vm306 = vcmask 490496
  %v308 = vsel %vm306, %v264, 0
  %v311 = vsel %vm306, %v265, 0
  %v314 = vsel %vm306, %v266, 0
  %v317 = vsel %vm306, %v267, 0
  %v320 = vsel %vm306, %v268, 0
  %v323 = vsel %vm306, %v269, 0
  %vm325 = vcmask 1043456
  %v327 = vsel %vm325, %v263, 0
  %329 = vmatpush.msra.mxu0 0.0
  %330 = vmatpush.msra.mxu0 0.0
  %331 = vmatpush.msra.mxu0 0.0
  %332 = vmatpush.msra.mxu0 0.0
  %333 = vmatpush.msra.mxu0 0.0
  %334 = vmatpush.msra.mxu0 0.0
  %335 = vmatpush.msra.mxu0 0.0
  %336 = vmatpush.msra.mxu0 0.0
  %337 = vmatpush.msra.mxu0 %v327
  %338 = vmatpush.msra.mxu0 %v262
  %339 = vmatpush.msra.mxu0 %v261
  %340 = vmatpush.msra.mxu0 %v260
  %341 = vmatpush.msra.mxu0 %v259
  %342 = vmatpush.msra.mxu0 %v258
  %343 = vmatpush.msra.mxu0 %v257
  %344 = vmatpush.msra.mxu0 %v256
  %345 = vmatmul.f32.gmra.mxu0 %v308
  %v346 = vpop.f32.mrf.mxu0
  %v347 = vadd.f32 %v279, %v346
  %348 = vmatmul.f32.gmra.mxu0 %v311
  %v349 = vpop.f32.mrf.mxu0
  %v350 = vadd.f32 %v284, %v349
  %351 = vmatmul.f32.gmra.mxu0 %v314
  %v352 = vpop.f32.mrf.mxu0
  %v353 = vadd.f32 %v289, %v352
  %354 = vmatmul.f32.gmra.mxu0 %v317
  %v355 = vpop.f32.mrf.mxu0
  %v356 = vadd.f32 %v294, %v355
  %357 = vmatmul.f32.gmra.mxu0 %v320
  %v358 = vpop.f32.mrf.mxu0
  %v359 = vadd.f32 %v299, %v358
  %360 = vmatmul.f32.gmra.mxu0 %v323
  %v361 = vpop.f32.mrf.mxu0
  %v362 = vadd.f32 %v304, %v361
  %363 = vdwg.mxu0
  %v364 = vtanh.pop %v347
  %v365 = vtanh.pop %v350
  %v366 = vtanh.pop %v353
  %v367 = vtanh.pop %v356
  %v368 = vtanh.pop %v359
  %v369 = vtanh.pop %v362
  %v370 = vld [vmem:[%s6] sm:$0xff]
  %v371 = vld [vmem:[%s6 + $0x8] sm:$0xff]
  %v372 = vld [vmem:[%s6 + $0x10] sm:$0xff]
  %v373 = vld [vmem:[%s6 + $0x18] sm:$0xff]
  %v374 = vld [vmem:[%s6 + $0x20] sm:$0xff]
  %v375 = vld [vmem:[%s6 + $0x28] sm:$0xff]
  %v377 = vsel %vm178, %v370, 0
  %v380 = vsel %vm178, %v371, 0
  %v383 = vsel %vm178, %v372, 0
  %v386 = vsel %vm178, %v373, 0
  %v389 = vsel %vm178, %v374, 0
  %v392 = vsel %vm178, %v375, 0
  %394 = vmatpush.msra.mxu0 0.0
  %395 = vmatpush.msra.mxu0 0.0
  %396 = vmatpush.msra.mxu0 0.0
  %397 = vmatpush.msra.mxu0 0.0
  %398 = vmatpush.msra.mxu0 0.0
  %399 = vmatpush.msra.mxu0 0.0
  %400 = vmatpush.msra.mxu0 0.0
  %401 = vmatpush.msra.mxu0 %v205
  %402 = vmatpush.msra.mxu0 %v120
  %403 = vmatpush.msra.mxu0 %v119
  %404 = vmatpush.msra.mxu0 %v118
  %405 = vmatpush.msra.mxu0 %v117
  %406 = vmatpush.msra.mxu0 %v116
  %407 = vmatpush.msra.mxu0 %v115
  %408 = vmatpush.msra.mxu0 %v114
  %409 = vmatpush.msra.mxu0 %v113
  %410 = vmatmul.f32.gmra.mxu0 %v377
  %v411 = vpop.f32.mrf.mxu0
  %v412 = vadd.f32 0.0, %v411
  %413 = vmatmul.f32.gmra.mxu0 %v380
  %v414 = vpop.f32.mrf.mxu0
  %v415 = vadd.f32 0.0, %v414
  %416 = vmatmul.f32.gmra.mxu0 %v383
  %v417 = vpop.f32.mrf.mxu0
  %v418 = vadd.f32 0.0, %v417
  %419 = vmatmul.f32.gmra.mxu0 %v386
  %v420 = vpop.f32.mrf.mxu0
  %v421 = vadd.f32 0.0, %v420
  %422 = vmatmul.f32.gmra.mxu0 %v389
  %v423 = vpop.f32.mrf.mxu0
  %v424 = vadd.f32 0.0, %v423
  %425 = vmatmul.f32.gmra.mxu0 %v392
  %v426 = vpop.f32.mrf.mxu0
  %v427 = vadd.f32 0.0, %v426
  %428 = vdwg.mxu0
  %v429 = vmul.f32 %v364, 1.442695
  %v430 = vpow.pop %v429
  %v431 = vmul.f32 %v365, 1.442695
  %v432 = vpow.pop %v431
  %v433 = vmul.f32 %v366, 1.442695
  %v434 = vpow.pop %v433
  %v435 = vmul.f32 %v367, 1.442695
  %v436 = vpow.pop %v435
  %v437 = vmul.f32 %v368, 1.442695
  %v438 = vpow.pop %v437
  %v439 = vmul.f32 %v369, 1.442695
  %v440 = vpow.pop %v439
  %v441 = vmul.f32 %v412, %v430
  %v442 = vmul.f32 %v415, %v432
  %v443 = vmul.f32 %v418, %v434
  %v444 = vmul.f32 %v421, %v436
  %v445 = vmul.f32 %v424, %v438
  %v446 = vmul.f32 %v427, %v440
  %v447 = vld [vmem:[%s7] sm:$0xff]
  %v448 = vld [vmem:[%s7 + $0x8] sm:$0xff]
  %v449 = vld [vmem:[%s7 + $0x10] sm:$0xff]
  %v450 = vld [vmem:[%s7 + $0x18] sm:$0xff]
  %v451 = vld [vmem:[%s7 + $0x20] sm:$0xff]
  %v452 = vld [vmem:[%s7 + $0x28] sm:$0xff]
  %v453 = vld [vmem:[%s7 + $0x30] sm:$0xff]
  %v454 = vld [vmem:[%s7 + $0x38] sm:$0xf]
  %v455 = vld [vmem:[%s8] sm:$0xff]
  %v456 = vld [vmem:[%s8 + $0x8] sm:$0xff]
  %v457 = vld [vmem:[%s8 + $0x10] sm:$0xff]
  %v458 = vld [vmem:[%s8 + $0x18] sm:$0xff]
  %v459 = vld [vmem:[%s8 + $0x20] sm:$0xff]
  %v460 = vld [vmem:[%s8 + $0x28] sm:$0xff]
  %v461 = vld [vmem:[%s8 + $0x30] sm:$0xff]
  %v462 = vld [vmem:[%s8 + $0x38] sm:$0xf]
  %464 = vset.pattern.permute.xlu0 0
  %465 = vperm.xlu0 %464, %v455
  %v466 = vpop.permute.xlu0 %465
  %469 = vset.pattern.permute.xlu0 0
  %470 = vperm.xlu0 %469, %v456
  %v471 = vpop.permute.xlu0 %470
  %474 = vset.pattern.permute.xlu0 0
  %475 = vperm.xlu0 %474, %v457
  %v476 = vpop.permute.xlu0 %475
  %479 = vset.pattern.permute.xlu0 0
  %480 = vperm.xlu0 %479, %v458
  %v481 = vpop.permute.xlu0 %480
  %484 = vset.pattern.permute.xlu0 0
  %485 = vperm.xlu0 %484, %v459
  %v486 = vpop.permute.xlu0 %485
  %489 = vset.pattern.permute.xlu0 0
  %490 = vperm.xlu0 %489, %v460
  %v491 = vpop.permute.xlu0 %490
  %494 = vset.pattern.permute.xlu0 0
  %495 = vperm.xlu0 %494, %v461
  %v496 = vpop.permute.xlu0 %495
  %499 = vset.pattern.permute.xlu0 0
  %500 = vperm.xlu0 %499, %v462
  %v501 = vpop.permute.xlu0 %500
  %vm503 = vcmask 392192
  %v505 = vsel %vm503, %v447, 0
  %v508 = vsel %vm503, %v448, 0
  %v511 = vsel %vm503, %v449, 0
  %v514 = vsel %vm503, %v450, 0
  %v517 = vsel %vm503, %v451, 0
  %v520 = vsel %vm503, %v452, 0
  %v523 = vsel %vm503, %v453, 0
  %v526 = vsel %vm503, %v454, 0
  %528 = vmatpush.msra.mxu0 0.0
  %529 = vmatpush.msra.mxu0 0.0
  %530 = vmatpush.msra.mxu0 0.0
  %531 = vmatpush.msra.mxu0 0.0
  %532 = vmatpush.msra.mxu0 0.0
  %533 = vmatpush.msra.mxu0 0.0
  %534 = vmatpush.msra.mxu0 0.0
  %535 = vmatpush.msra.mxu0 0.0
  %536 = vmatpush.msra.mxu0 0.0
  %537 = vmatpush.msra.mxu0 0.0
  %538 = vmatpush.msra.mxu0 %v446
  %539 = vmatpush.msra.mxu0 %v445
  %540 = vmatpush.msra.mxu0 %v444
  %541 = vmatpush.msra.mxu0 %v443
  %542 = vmatpush.msra.mxu0 %v442
  %543 = vmatpush.msra.mxu0 %v441
  %544 = vmatmul.f32.gmra.mxu0 %v505
  %v545 = vpop.f32.mrf.mxu0
  %v546 = vadd.f32 %v466, %v545
  %547 = vmatmul.f32.gmra.mxu0 %v508
  %v548 = vpop.f32.mrf.mxu0
  %v549 = vadd.f32 %v471, %v548
  %550 = vmatmul.f32.gmra.mxu0 %v511
  %v551 = vpop.f32.mrf.mxu0
  %v552 = vadd.f32 %v476, %v551
  %553 = vmatmul.f32.gmra.mxu0 %v514
  %v554 = vpop.f32.mrf.mxu0
  %v555 = vadd.f32 %v481, %v554
  %556 = vmatmul.f32.gmra.mxu0 %v517
  %v557 = vpop.f32.mrf.mxu0
  %v558 = vadd.f32 %v486, %v557
  %559 = vmatmul.f32.gmra.mxu0 %v520
  %v560 = vpop.f32.mrf.mxu0
  %v561 = vadd.f32 %v491, %v560
  %562 = vmatmul.f32.gmra.mxu0 %v523
  %v563 = vpop.f32.mrf.mxu0
  %v564 = vadd.f32 %v496, %v563
  %565 = vmatmul.f32.gmra.mxu0 %v526
  %v566 = vpop.f32.mrf.mxu0
  %v567 = vadd.f32 %v501, %v566
  %568 = vdwg.mxu0
  %v569 = vmul.f32 %v546, 0.01
  %v570 = vmul.f32 %v549, 0.01
  %v571 = vmul.f32 %v552, 0.01
  %v572 = vmul.f32 %v555, 0.01
  %v573 = vmul.f32 %v558, 0.01
  %v574 = vmul.f32 %v561, 0.01
  %v575 = vmul.f32 %v564, 0.01
  %v576 = vmul.f32 %v567, 0.01
  %v577 = vmax.f32 %v546, %v569
  %v578 = vmax.f32 %v549, %v570
  %v579 = vmax.f32 %v552, %v571
  %v580 = vmax.f32 %v555, %v572
  %v581 = vmax.f32 %v558, %v573
  %v582 = vmax.f32 %v561, %v574
  %v583 = vmax.f32 %v564, %v575
  %v584 = vmax.f32 %v567, %v576
  %v585 = vld [vmem:[%s9] sm:$0xff]
  %v586 = vld [vmem:[%s9 + $0x8] sm:$0xff]
  %v587 = vld [vmem:[%s9 + $0x10] sm:$0xff]
  %v588 = vld [vmem:[%s9 + $0x18] sm:$0xff]
  %v589 = vld [vmem:[%s9 + $0x20] sm:$0xff]
  %v590 = vld [vmem:[%s9 + $0x28] sm:$0xff]
  %v591 = vld [vmem:[%s10] sm:$0xff]
  %v592 = vld [vmem:[%s10 + $0x8] sm:$0xff]
  %v593 = vld [vmem:[%s10 + $0x10] sm:$0xff]
  %v594 = vld [vmem:[%s10 + $0x18] sm:$0xff]
  %v595 = vld [vmem:[%s10 + $0x20] sm:$0xff]
  %v596 = vld [vmem:[%s10 + $0x28] sm:$0xff]
  %598 = vset.pattern.permute.xlu0 0
  %599 = vperm.xlu0 %598, %v591
  %v600 = vpop.permute.xlu0 %599
  %603 = vset.pattern.permute.xlu0 0
  %604 = vperm.xlu0 %603, %v592
  %v605 = vpop.permute.xlu0 %604
  %608 = vset.pattern.permute.xlu0 0
  %609 = vperm.xlu0 %608, %v593
  %v610 = vpop.permute.xlu0 %609
  %613 = vset.pattern.permute.xlu0 0
  %614 = vperm.xlu0 %613, %v594
  %v615 = vpop.permute.xlu0 %614
  %618 = vset.pattern.permute.xlu0 0
  %619 = vperm.xlu0 %618, %v595
  %v620 = vpop.permute.xlu0 %619
  %623 = vset.pattern.permute.xlu0 0
  %624 = vperm.xlu0 %623, %v596
  %v625 = vpop.permute.xlu0 %624
  %v628 = vsel %vm306, %v585, 0
  %v631 = vsel %vm306, %v586, 0
  %v634 = vsel %vm306, %v587, 0
  %v637 = vsel %vm306, %v588, 0
  %v640 = vsel %vm306, %v589, 0
  %v643 = vsel %vm306, %v590, 0
  %v646 = vsel %vm325, %v584, 0
  %648 = vmatpush.msra.mxu0 0.0
  %649 = vmatpush.msra.mxu0 0.0
  %650 = vmatpush.msra.mxu0 0.0
  %651 = vmatpush.msra.mxu0 0.0
  %652 = vmatpush.msra.mxu0 0.0
  %653 = vmatpush.msra.mxu0 0.0
  %654 = vmatpush.msra.mxu0 0.0
  %655 = vmatpush.msra.mxu0 0.0
  %656 = vmatpush.msra.mxu0 %v646
  %657 = vmatpush.msra.mxu0 %v583
  %658 = vmatpush.msra.mxu0 %v582
  %659 = vmatpush.msra.mxu0 %v581
  %660 = vmatpush.msra.mxu0 %v580
  %661 = vmatpush.msra.mxu0 %v579
  %662 = vmatpush.msra.mxu0 %v578
  %663 = vmatpush.msra.mxu0 %v577
  %664 = vmatmul.f32.gmra.mxu0 %v628
  %v665 = vpop.f32.mrf.mxu0
  %v666 = vadd.f32 %v600, %v665
  %667 = vmatmul.f32.gmra.mxu0 %v631
  %v668 = vpop.f32.mrf.mxu0
  %v669 = vadd.f32 %v605, %v668
  %670 = vmatmul.f32.gmra.mxu0 %v634
  %v671 = vpop.f32.mrf.mxu0
  %v672 = vadd.f32 %v610, %v671
  %673 = vmatmul.f32.gmra.mxu0 %v637
  %v674 = vpop.f32.mrf.mxu0
  %v675 = vadd.f32 %v615, %v674
  %676 = vmatmul.f32.gmra.mxu0 %v640
  %v677 = vpop.f32.mrf.mxu0
  %v678 = vadd.f32 %v620, %v677
  %679 = vmatmul.f32.gmra.mxu0 %v643
  %v680 = vpop.f32.mrf.mxu0
  %v681 = vadd.f32 %v625, %v680
  %682 = vdwg.mxu0
  %v683 = vtanh.pop %v666
  %v684 = vtanh.pop %v669
  %v685 = vtanh.pop %v672
  %v686 = vtanh.pop %v675
  %v687 = vtanh.pop %v678
  %v688 = vtanh.pop %v681
  %v689 = vld [vmem:[%s11] sm:$0xff]
  %v690 = vld [vmem:[%s11 + $0x8] sm:$0xff]
  %v691 = vld [vmem:[%s11 + $0x10] sm:$0xff]
  %v692 = vld [vmem:[%s11 + $0x18] sm:$0xff]
  %v693 = vld [vmem:[%s11 + $0x20] sm:$0xff]
  %v694 = vld [vmem:[%s11 + $0x28] sm:$0xff]
  %v695 = vld [vmem:[%s12] sm:$0xff]
  %v696 = vld [vmem:[%s12 + $0x8] sm:$0xff]
  %v697 = vld [vmem:[%s12 + $0x10] sm:$0xff]
  %v698 = vld [vmem:[%s12 + $0x18] sm:$0xff]
  %v699 = vld [vmem:[%s12 + $0x20] sm:$0xff]
  %v700 = vld [vmem:[%s12 + $0x28] sm:$0xff]
  %v702 = vsel %vm503, %v695, 0
  %v705 = vsel %vm503, %v696, 0
  %v708 = vsel %vm503, %v697, 0
  %v711 = vsel %vm503, %v698, 0
  %v714 = vsel %vm503, %v699, 0
  %v717 = vsel %vm503, %v700, 0
  %719 = vmatpush.msra.mxu0 0.0
  %720 = vmatpush.msra.mxu0 0.0
  %721 = vmatpush.msra.mxu0 0.0
  %722 = vmatpush.msra.mxu0 0.0
  %723 = vmatpush.msra.mxu0 0.0
  %724 = vmatpush.msra.mxu0 0.0
  %725 = vmatpush.msra.mxu0 0.0
  %726 = vmatpush.msra.mxu0 0.0
  %727 = vmatpush.msra.mxu0 0.0
  %728 = vmatpush.msra.mxu0 0.0
  %729 = vmatpush.msra.mxu0 %v688
  %730 = vmatpush.msra.mxu0 %v687
  %731 = vmatpush.msra.mxu0 %v686
  %732 = vmatpush.msra.mxu0 %v685
  %733 = vmatpush.msra.mxu0 %v684
  %734 = vmatpush.msra.mxu0 %v683
  %735 = vmatmul.f32.gmra.mxu0 %v702
  %v736 = vpop.f32.mrf.mxu0
  %v737 = vadd.f32 0.0, %v736
  %738 = vmatmul.f32.gmra.mxu0 %v705
  %v739 = vpop.f32.mrf.mxu0
  %v740 = vadd.f32 0.0, %v739
  %741 = vmatmul.f32.gmra.mxu0 %v708
  %v742 = vpop.f32.mrf.mxu0
  %v743 = vadd.f32 0.0, %v742
  %744 = vmatmul.f32.gmra.mxu0 %v711
  %v745 = vpop.f32.mrf.mxu0
  %v746 = vadd.f32 0.0, %v745
  %747 = vmatmul.f32.gmra.mxu0 %v714
  %v748 = vpop.f32.mrf.mxu0
  %v749 = vadd.f32 0.0, %v748
  %750 = vmatmul.f32.gmra.mxu0 %v717
  %v751 = vpop.f32.mrf.mxu0
  %v752 = vadd.f32 0.0, %v751
  %753 = vdwg.mxu0
  %v755 = vsel %vm503, %v689, 0
  %v758 = vsel %vm503, %v690, 0
  %v761 = vsel %vm503, %v691, 0
  %v764 = vsel %vm503, %v692, 0
  %v767 = vsel %vm503, %v693, 0
  %v770 = vsel %vm503, %v694, 0
  %772 = vmatpush.msra.mxu0 0.0
  %773 = vmatpush.msra.mxu0 0.0
  %774 = vmatpush.msra.mxu0 0.0
  %775 = vmatpush.msra.mxu0 0.0
  %776 = vmatpush.msra.mxu0 0.0
  %777 = vmatpush.msra.mxu0 0.0
  %778 = vmatpush.msra.mxu0 0.0
  %779 = vmatpush.msra.mxu0 0.0
  %780 = vmatpush.msra.mxu0 0.0
  %781 = vmatpush.msra.mxu0 0.0
  %782 = vmatpush.msra.mxu0 %v446
  %783 = vmatpush.msra.mxu0 %v445
  %784 = vmatpush.msra.mxu0 %v444
  %785 = vmatpush.msra.mxu0 %v443
  %786 = vmatpush.msra.mxu0 %v442
  %787 = vmatpush.msra.mxu0 %v441
  %788 = vmatmul.f32.gmra.mxu0 %v755
  %v789 = vpop.f32.mrf.mxu0
  %v790 = vadd.f32 %v737, %v789
  %791 = vmatmul.f32.gmra.mxu0 %v758
  %v792 = vpop.f32.mrf.mxu0
  %v793 = vadd.f32 %v740, %v792
  %794 = vmatmul.f32.gmra.mxu0 %v761
  %v795 = vpop.f32.mrf.mxu0
  %v796 = vadd.f32 %v743, %v795
  %797 = vmatmul.f32.gmra.mxu0 %v764
  %v798 = vpop.f32.mrf.mxu0
  %v799 = vadd.f32 %v746, %v798
  %800 = vmatmul.f32.gmra.mxu0 %v767
  %v801 = vpop.f32.mrf.mxu0
  %v802 = vadd.f32 %v749, %v801
  %803 = vmatmul.f32.gmra.mxu0 %v770
  %v804 = vpop.f32.mrf.mxu0
  %v805 = vadd.f32 %v752, %v804
  %806 = vdwg.mxu0
  %v807 = vld [vmem:[%s14] sm:$0xff]
  %v808 = vld [vmem:[%s14 + $0x8] sm:$0xff]
  %v809 = vld [vmem:[%s14 + $0x10] sm:$0xff]
  %v810 = vld [vmem:[%s14 + $0x18] sm:$0xff]
  %v811 = vld [vmem:[%s14 + $0x20] sm:$0xff]
  %v812 = vld [vmem:[%s14 + $0x28] sm:$0xff]
  %v813 = vld [vmem:[%s14 + $0x30] sm:$0xff]
  %v814 = vld [vmem:[%s14 + $0x38] sm:$0xff]
  %v815 = vld [vmem:[%s14 + $0x40] sm:$0x3]
  %817 = vset.pattern.permute.xlu0 0
  %818 = vperm.xlu0 %817, %v807
  %v819 = vpop.permute.xlu0 %818
  %822 = vset.pattern.permute.xlu0 0
  %823 = vperm.xlu0 %822, %v808
  %v824 = vpop.permute.xlu0 %823
  %827 = vset.pattern.permute.xlu0 0
  %828 = vperm.xlu0 %827, %v809
  %v829 = vpop.permute.xlu0 %828
  %832 = vset.pattern.permute.xlu0 0
  %833 = vperm.xlu0 %832, %v810
  %v834 = vpop.permute.xlu0 %833
  %837 = vset.pattern.permute.xlu0 0
  %838 = vperm.xlu0 %837, %v811
  %v839 = vpop.permute.xlu0 %838
  %842 = vset.pattern.permute.xlu0 0
  %843 = vperm.xlu0 %842, %v812
  %v844 = vpop.permute.xlu0 %843
  %847 = vset.pattern.permute.xlu0 0
  %848 = vperm.xlu0 %847, %v813
  %v849 = vpop.permute.xlu0 %848
  %852 = vset.pattern.permute.xlu0 0
  %853 = vperm.xlu0 %852, %v814
  %v854 = vpop.permute.xlu0 %853
  %857 = vset.pattern.permute.xlu0 0
  %858 = vperm.xlu0 %857, %v815
  %v859 = vpop.permute.xlu0 %858
  %v861 = vmul.f32 %v113, %v819
  %v862 = vmul.f32 %v114, %v824
  %v863 = vmul.f32 %v115, %v829
  %v864 = vmul.f32 %v116, %v834
  %v865 = vmul.f32 %v117, %v839
  %v866 = vmul.f32 %v118, %v844
  %v867 = vmul.f32 %v119, %v849
  %v868 = vmul.f32 %v120, %v854
  %v869 = vmul.f32 %v121, %v859
  %v870 = vld [vmem:[%s13] sm:$0xff]
  %v871 = vld [vmem:[%s13 + $0x8] sm:$0xff]
  %v872 = vld [vmem:[%s13 + $0x10] sm:$0xff]
  %v873 = vld [vmem:[%s13 + $0x18] sm:$0xff]
  %v874 = vld [vmem:[%s13 + $0x20] sm:$0xff]
  %v875 = vld [vmem:[%s13 + $0x28] sm:$0xff]
  %v876 = vld [vmem:[%s13 + $0x30] sm:$0xff]
  %v877 = vld [vmem:[%s13 + $0x38] sm:$0xff]
  %v878 = vld [vmem:[%s13 + $0x40] sm:$0x3]
  %v880 = vsel %vm503, %v870, 0
  %v883 = vsel %vm503, %v871, 0
  %v886 = vsel %vm503, %v872, 0
  %v889 = vsel %vm503, %v873, 0
  %v892 = vsel %vm503, %v874, 0
  %v895 = vsel %vm503, %v875, 0
  %v898 = vsel %vm503, %v876, 0
  %v901 = vsel %vm503, %v877, 0
  %v904 = vsel %vm503, %v878, 0
  %906 = vmatpush.msra.mxu0 0.0
  %907 = vmatpush.msra.mxu0 0.0
  %908 = vmatpush.msra.mxu0 0.0
  %909 = vmatpush.msra.mxu0 0.0
  %910 = vmatpush.msra.mxu0 0.0
  %911 = vmatpush.msra.mxu0 0.0
  %912 = vmatpush.msra.mxu0 0.0
  %913 = vmatpush.msra.mxu0 0.0
  %914 = vmatpush.msra.mxu0 0.0
  %915 = vmatpush.msra.mxu0 0.0
  %916 = vmatpush.msra.mxu0 %v805
  %917 = vmatpush.msra.mxu0 %v802
  %918 = vmatpush.msra.mxu0 %v799
  %919 = vmatpush.msra.mxu0 %v796
  %920 = vmatpush.msra.mxu0 %v793
  %921 = vmatpush.msra.mxu0 %v790
  %922 = vmatmul.f32.gmra.mxu0 %v880
  %v923 = vpop.f32.mrf.mxu0
  %v924 = vadd.f32 0.0, %v923
  %925 = vmatmul.f32.gmra.mxu0 %v883
  %v926 = vpop.f32.mrf.mxu0
  %v927 = vadd.f32 0.0, %v926
  %928 = vmatmul.f32.gmra.mxu0 %v886
  %v929 = vpop.f32.mrf.mxu0
  %v930 = vadd.f32 0.0, %v929
  %931 = vmatmul.f32.gmra.mxu0 %v889
  %v932 = vpop.f32.mrf.mxu0
  %v933 = vadd.f32 0.0, %v932
  %934 = vmatmul.f32.gmra.mxu0 %v892
  %v935 = vpop.f32.mrf.mxu0
  %v936 = vadd.f32 0.0, %v935
  %937 = vmatmul.f32.gmra.mxu0 %v895
  %v938 = vpop.f32.mrf.mxu0
  %v939 = vadd.f32 0.0, %v938
  %940 = vmatmul.f32.gmra.mxu0 %v898
  %v941 = vpop.f32.mrf.mxu0
  %v942 = vadd.f32 0.0, %v941
  %943 = vmatmul.f32.gmra.mxu0 %v901
  %v944 = vpop.f32.mrf.mxu0
  %v945 = vadd.f32 0.0, %v944
  %946 = vmatmul.f32.gmra.mxu0 %v904
  %v947 = vpop.f32.mrf.mxu0
  %v948 = vadd.f32 0.0, %v947
  %949 = vdwg.mxu0
  %v950 = vadd.f32 %v861, %v924
  %v951 = vadd.f32 %v862, %v927
  %v952 = vadd.f32 %v863, %v930
  %v953 = vadd.f32 %v864, %v933
  %v954 = vadd.f32 %v865, %v936
  %v955 = vadd.f32 %v866, %v939
  %v956 = vadd.f32 %v867, %v942
  %v957 = vadd.f32 %v868, %v945
  %v958 = vadd.f32 %v869, %v948
  %s959 = scalar_lea.vmem %s2, 64
  %v960 = vld [vmem:[%s959] sm:$0xff]
  %v961 = vld [vmem:[%s959 + $0x8] sm:$0xff]
  %v962 = vld [vmem:[%s959 + $0x10] sm:$0xff]
  %v963 = vld [vmem:[%s959 + $0x18] sm:$0xff]
  %v964 = vld [vmem:[%s959 + $0x20] sm:$0xff]
  %v965 = vld [vmem:[%s959 + $0x28] sm:$0xff]
  %v966 = vld [vmem:[%s959 + $0x30] sm:$0xff]
  %v967 = vld [vmem:[%s959 + $0x38] sm:$0xf]
  %s968 = scalar_lea.vmem %s3, 64
  %v969 = vld [vmem:[%s968] sm:$0xff]
  %v970 = vld [vmem:[%s968 + $0x8] sm:$0xff]
  %v971 = vld [vmem:[%s968 + $0x10] sm:$0xff]
  %v972 = vld [vmem:[%s968 + $0x18] sm:$0xff]
  %v973 = vld [vmem:[%s968 + $0x20] sm:$0xff]
  %v974 = vld [vmem:[%s968 + $0x28] sm:$0xff]
  %v975 = vld [vmem:[%s968 + $0x30] sm:$0xff]
  %v976 = vld [vmem:[%s968 + $0x38] sm:$0xf]
  %978 = vset.pattern.permute.xlu0 0
  %979 = vperm.xlu0 %978, %v969
  %v980 = vpop.permute.xlu0 %979
  %983 = vset.pattern.permute.xlu0 0
  %984 = vperm.xlu0 %983, %v970
  %v985 = vpop.permute.xlu0 %984
  %988 = vset.pattern.permute.xlu0 0
  %989 = vperm.xlu0 %988, %v971
  %v990 = vpop.permute.xlu0 %989
  %993 = vset.pattern.permute.xlu0 0
  %994 = vperm.xlu0 %993, %v972
  %v995 = vpop.permute.xlu0 %994
  %998 = vset.pattern.permute.xlu0 0
  %999 = vperm.xlu0 %998, %v973
  %v1000 = vpop.permute.xlu0 %999
  %1003 = vset.pattern.permute.xlu0 0
  %1004 = vperm.xlu0 %1003, %v974
  %v1005 = vpop.permute.xlu0 %1004
  %1008 = vset.pattern.permute.xlu0 0
  %1009 = vperm.xlu0 %1008, %v975
  %v1010 = vpop.permute.xlu0 %1009
  %1013 = vset.pattern.permute.xlu0 0
  %1014 = vperm.xlu0 %1013, %v976
  %v1015 = vpop.permute.xlu0 %1014
  %v1018 = vsel %vm178, %v960, 0
  %v1021 = vsel %vm178, %v961, 0
  %v1024 = vsel %vm178, %v962, 0
  %v1027 = vsel %vm178, %v963, 0
  %v1030 = vsel %vm178, %v964, 0
  %v1033 = vsel %vm178, %v965, 0
  %v1036 = vsel %vm178, %v966, 0
  %v1039 = vsel %vm178, %v967, 0
  %v1042 = vsel %vm203, %v958, 0
  %1044 = vmatpush.msra.mxu0 0.0
  %1045 = vmatpush.msra.mxu0 0.0
  %1046 = vmatpush.msra.mxu0 0.0
  %1047 = vmatpush.msra.mxu0 0.0
  %1048 = vmatpush.msra.mxu0 0.0
  %1049 = vmatpush.msra.mxu0 0.0
  %1050 = vmatpush.msra.mxu0 0.0
  %1051 = vmatpush.msra.mxu0 %v1042
  %1052 = vmatpush.msra.mxu0 %v957
  %1053 = vmatpush.msra.mxu0 %v956
  %1054 = vmatpush.msra.mxu0 %v955
  %1055 = vmatpush.msra.mxu0 %v954
  %1056 = vmatpush.msra.mxu0 %v953
  %1057 = vmatpush.msra.mxu0 %v952
  %1058 = vmatpush.msra.mxu0 %v951
  %1059 = vmatpush.msra.mxu0 %v950
  %1060 = vmatmul.f32.gmra.mxu0 %v1018
  %v1061 = vpop.f32.mrf.mxu0
  %v1062 = vadd.f32 %v980, %v1061
  %1063 = vmatmul.f32.gmra.mxu0 %v1021
  %v1064 = vpop.f32.mrf.mxu0
  %v1065 = vadd.f32 %v985, %v1064
  %1066 = vmatmul.f32.gmra.mxu0 %v1024
  %v1067 = vpop.f32.mrf.mxu0
  %v1068 = vadd.f32 %v990, %v1067
  %1069 = vmatmul.f32.gmra.mxu0 %v1027
  %v1070 = vpop.f32.mrf.mxu0
  %v1071 = vadd.f32 %v995, %v1070
  %1072 = vmatmul.f32.gmra.mxu0 %v1030
  %v1073 = vpop.f32.mrf.mxu0
  %v1074 = vadd.f32 %v1000, %v1073
  %1075 = vmatmul.f32.gmra.mxu0 %v1033
  %v1076 = vpop.f32.mrf.mxu0
  %v1077 = vadd.f32 %v1005, %v1076
  %1078 = vmatmul.f32.gmra.mxu0 %v1036
  %v1079 = vpop.f32.mrf.mxu0
  %v1080 = vadd.f32 %v1010, %v1079
  %1081 = vmatmul.f32.gmra.mxu0 %v1039
  %v1082 = vpop.f32.mrf.mxu0
  %v1083 = vadd.f32 %v1015, %v1082
  %1084 = vdwg.mxu0
  %v1085 = vmul.f32 %v1062, 0.01
  %v1086 = vmul.f32 %v1065, 0.01
  %v1087 = vmul.f32 %v1068, 0.01
  %v1088 = vmul.f32 %v1071, 0.01
  %v1089 = vmul.f32 %v1074, 0.01
  %v1090 = vmul.f32 %v1077, 0.01
  %v1091 = vmul.f32 %v1080, 0.01
  %v1092 = vmul.f32 %v1083, 0.01
  %v1093 = vmax.f32 %v1062, %v1085
  %v1094 = vmax.f32 %v1065, %v1086
  %v1095 = vmax.f32 %v1068, %v1087
  %v1096 = vmax.f32 %v1071, %v1088
  %v1097 = vmax.f32 %v1074, %v1089
  %v1098 = vmax.f32 %v1077, %v1090
  %v1099 = vmax.f32 %v1080, %v1091
  %v1100 = vmax.f32 %v1083, %v1092
  %s1101 = scalar_lea.vmem %s4, 48
  %v1102 = vld [vmem:[%s1101] sm:$0xff]
  %v1103 = vld [vmem:[%s1101 + $0x8] sm:$0xff]
  %v1104 = vld [vmem:[%s1101 + $0x10] sm:$0xff]
  %v1105 = vld [vmem:[%s1101 + $0x18] sm:$0xff]
  %v1106 = vld [vmem:[%s1101 + $0x20] sm:$0xff]
  %v1107 = vld [vmem:[%s1101 + $0x28] sm:$0xff]
  %s1108 = scalar_lea.vmem %s5, 48
  %v1109 = vld [vmem:[%s1108] sm:$0xff]
  %v1110 = vld [vmem:[%s1108 + $0x8] sm:$0xff]
  %v1111 = vld [vmem:[%s1108 + $0x10] sm:$0xff]
  %v1112 = vld [vmem:[%s1108 + $0x18] sm:$0xff]
  %v1113 = vld [vmem:[%s1108 + $0x20] sm:$0xff]
  %v1114 = vld [vmem:[%s1108 + $0x28] sm:$0xff]
  %1116 = vset.pattern.permute.xlu0 0
  %1117 = vperm.xlu0 %1116, %v1109
  %v1118 = vpop.permute.xlu0 %1117
  %1121 = vset.pattern.permute.xlu0 0
  %1122 = vperm.xlu0 %1121, %v1110
  %v1123 = vpop.permute.xlu0 %1122
  %1126 = vset.pattern.permute.xlu0 0
  %1127 = vperm.xlu0 %1126, %v1111
  %v1128 = vpop.permute.xlu0 %1127
  %1131 = vset.pattern.permute.xlu0 0
  %1132 = vperm.xlu0 %1131, %v1112
  %v1133 = vpop.permute.xlu0 %1132
  %1136 = vset.pattern.permute.xlu0 0
  %1137 = vperm.xlu0 %1136, %v1113
  %v1138 = vpop.permute.xlu0 %1137
  %1141 = vset.pattern.permute.xlu0 0
  %1142 = vperm.xlu0 %1141, %v1114
  %v1143 = vpop.permute.xlu0 %1142
  %v1146 = vsel %vm306, %v1102, 0
  %v1149 = vsel %vm306, %v1103, 0
  %v1152 = vsel %vm306, %v1104, 0
  %v1155 = vsel %vm306, %v1105, 0
  %v1158 = vsel %vm306, %v1106, 0
  %v1161 = vsel %vm306, %v1107, 0
  %v1164 = vsel %vm325, %v1100, 0
  %1166 = vmatpush.msra.mxu0 0.0
  %1167 = vmatpush.msra.mxu0 0.0
  %1168 = vmatpush.msra.mxu0 0.0
  %1169 = vmatpush.msra.mxu0 0.0
  %1170 = vmatpush.msra.mxu0 0.0
  %1171 = vmatpush.msra.mxu0 0.0
  %1172 = vmatpush.msra.mxu0 0.0
  %1173 = vmatpush.msra.mxu0 0.0
  %1174 = vmatpush.msra.mxu0 %v1164
  %1175 = vmatpush.msra.mxu0 %v1099
  %1176 = vmatpush.msra.mxu0 %v1098
  %1177 = vmatpush.msra.mxu0 %v1097
  %1178 = vmatpush.msra.mxu0 %v1096
  %1179 = vmatpush.msra.mxu0 %v1095
  %1180 = vmatpush.msra.mxu0 %v1094
  %1181 = vmatpush.msra.mxu0 %v1093
  %1182 = vmatmul.f32.gmra.mxu0 %v1146
  %v1183 = vpop.f32.mrf.mxu0
  %v1184 = vadd.f32 %v1118, %v1183
  %1185 = vmatmul.f32.gmra.mxu0 %v1149
  %v1186 = vpop.f32.mrf.mxu0
  %v1187 = vadd.f32 %v1123, %v1186
  %1188 = vmatmul.f32.gmra.mxu0 %v1152
  %v1189 = vpop.f32.mrf.mxu0
  %v1190 = vadd.f32 %v1128, %v1189
  %1191 = vmatmul.f32.gmra.mxu0 %v1155
  %v1192 = vpop.f32.mrf.mxu0
  %v1193 = vadd.f32 %v1133, %v1192
  %1194 = vmatmul.f32.gmra.mxu0 %v1158
  %v1195 = vpop.f32.mrf.mxu0
  %v1196 = vadd.f32 %v1138, %v1195
  %1197 = vmatmul.f32.gmra.mxu0 %v1161
  %v1198 = vpop.f32.mrf.mxu0
  %v1199 = vadd.f32 %v1143, %v1198
  %1200 = vdwg.mxu0
  %v1201 = vtanh.pop %v1184
  %v1202 = vtanh.pop %v1187
  %v1203 = vtanh.pop %v1190
  %v1204 = vtanh.pop %v1193
  %v1205 = vtanh.pop %v1196
  %v1206 = vtanh.pop %v1199
  %s1207 = scalar_lea.vmem %s6, 48
  %v1208 = vld [vmem:[%s1207] sm:$0xff]
  %v1209 = vld [vmem:[%s1207 + $0x8] sm:$0xff]
  %v1210 = vld [vmem:[%s1207 + $0x10] sm:$0xff]
  %v1211 = vld [vmem:[%s1207 + $0x18] sm:$0xff]
  %v1212 = vld [vmem:[%s1207 + $0x20] sm:$0xff]
  %v1213 = vld [vmem:[%s1207 + $0x28] sm:$0xff]
  %v1215 = vsel %vm178, %v1208, 0
  %v1218 = vsel %vm178, %v1209, 0
  %v1221 = vsel %vm178, %v1210, 0
  %v1224 = vsel %vm178, %v1211, 0
  %v1227 = vsel %vm178, %v1212, 0
  %v1230 = vsel %vm178, %v1213, 0
  %1232 = vmatpush.msra.mxu0 0.0
  %1233 = vmatpush.msra.mxu0 0.0
  %1234 = vmatpush.msra.mxu0 0.0
  %1235 = vmatpush.msra.mxu0 0.0
  %1236 = vmatpush.msra.mxu0 0.0
  %1237 = vmatpush.msra.mxu0 0.0
  %1238 = vmatpush.msra.mxu0 0.0
  %1239 = vmatpush.msra.mxu0 %v1042
  %1240 = vmatpush.msra.mxu0 %v957
  %1241 = vmatpush.msra.mxu0 %v956
  %1242 = vmatpush.msra.mxu0 %v955
  %1243 = vmatpush.msra.mxu0 %v954
  %1244 = vmatpush.msra.mxu0 %v953
  %1245 = vmatpush.msra.mxu0 %v952
  %1246 = vmatpush.msra.mxu0 %v951
  %1247 = vmatpush.msra.mxu0 %v950
  %1248 = vmatmul.f32.gmra.mxu0 %v1215
  %v1249 = vpop.f32.mrf.mxu0
  %v1250 = vadd.f32 0.0, %v1249
  %1251 = vmatmul.f32.gmra.mxu0 %v1218
  %v1252 = vpop.f32.mrf.mxu0
  %v1253 = vadd.f32 0.0, %v1252
  %1254 = vmatmul.f32.gmra.mxu0 %v1221
  %v1255 = vpop.f32.mrf.mxu0
  %v1256 = vadd.f32 0.0, %v1255
  %1257 = vmatmul.f32.gmra.mxu0 %v1224
  %v1258 = vpop.f32.mrf.mxu0
  %v1259 = vadd.f32 0.0, %v1258
  %1260 = vmatmul.f32.gmra.mxu0 %v1227
  %v1261 = vpop.f32.mrf.mxu0
  %v1262 = vadd.f32 0.0, %v1261
  %1263 = vmatmul.f32.gmra.mxu0 %v1230
  %v1264 = vpop.f32.mrf.mxu0
  %v1265 = vadd.f32 0.0, %v1264
  %1266 = vdwg.mxu0
  %v1267 = vmul.f32 %v1201, 1.442695
  %v1268 = vpow.pop %v1267
  %v1269 = vmul.f32 %v1202, 1.442695
  %v1270 = vpow.pop %v1269
  %v1271 = vmul.f32 %v1203, 1.442695
  %v1272 = vpow.pop %v1271
  %v1273 = vmul.f32 %v1204, 1.442695
  %v1274 = vpow.pop %v1273
  %v1275 = vmul.f32 %v1205, 1.442695
  %v1276 = vpow.pop %v1275
  %v1277 = vmul.f32 %v1206, 1.442695
  %v1278 = vpow.pop %v1277
  %v1279 = vmul.f32 %v1250, %v1268
  %v1280 = vmul.f32 %v1253, %v1270
  %v1281 = vmul.f32 %v1256, %v1272
  %v1282 = vmul.f32 %v1259, %v1274
  %v1283 = vmul.f32 %v1262, %v1276
  %v1284 = vmul.f32 %v1265, %v1278
  %s1285 = scalar_lea.vmem %s7, 64
  %v1286 = vld [vmem:[%s1285] sm:$0xff]
  %v1287 = vld [vmem:[%s1285 + $0x8] sm:$0xff]
  %v1288 = vld [vmem:[%s1285 + $0x10] sm:$0xff]
  %v1289 = vld [vmem:[%s1285 + $0x18] sm:$0xff]
  %v1290 = vld [vmem:[%s1285 + $0x20] sm:$0xff]
  %v1291 = vld [vmem:[%s1285 + $0x28] sm:$0xff]
  %v1292 = vld [vmem:[%s1285 + $0x30] sm:$0xff]
  %v1293 = vld [vmem:[%s1285 + $0x38] sm:$0xf]
  %s1294 = scalar_lea.vmem %s8, 64
  %v1295 = vld [vmem:[%s1294] sm:$0xff]
  %v1296 = vld [vmem:[%s1294 + $0x8] sm:$0xff]
  %v1297 = vld [vmem:[%s1294 + $0x10] sm:$0xff]
  %v1298 = vld [vmem:[%s1294 + $0x18] sm:$0xff]
  %v1299 = vld [vmem:[%s1294 + $0x20] sm:$0xff]
  %v1300 = vld [vmem:[%s1294 + $0x28] sm:$0xff]
  %v1301 = vld [vmem:[%s1294 + $0x30] sm:$0xff]
  %v1302 = vld [vmem:[%s1294 + $0x38] sm:$0xf]
  %1304 = vset.pattern.permute.xlu0 0
  %1305 = vperm.xlu0 %1304, %v1295
  %v1306 = vpop.permute.xlu0 %1305
  %1309 = vset.pattern.permute.xlu0 0
  %1310 = vperm.xlu0 %1309, %v1296
  %v1311 = vpop.permute.xlu0 %1310
  %1314 = vset.pattern.permute.xlu0 0
  %1315 = vperm.xlu0 %1314, %v1297
  %v1316 = vpop.permute.xlu0 %1315
  %1319 = vset.pattern.permute.xlu0 0
  %1320 = vperm.xlu0 %1319, %v1298
  %v1321 = vpop.permute.xlu0 %1320
  %1324 = vset.pattern.permute.xlu0 0
  %1325 = vperm.xlu0 %1324, %v1299
  %v1326 = vpop.permute.xlu0 %1325
  %1329 = vset.pattern.permute.xlu0 0
  %1330 = vperm.xlu0 %1329, %v1300
  %v1331 = vpop.permute.xlu0 %1330
  %1334 = vset.pattern.permute.xlu0 0
  %1335 = vperm.xlu0 %1334, %v1301
  %v1336 = vpop.permute.xlu0 %1335
  %1339 = vset.pattern.permute.xlu0 0
  %1340 = vperm.xlu0 %1339, %v1302
  %v1341 = vpop.permute.xlu0 %1340
  %v1344 = vsel %vm503, %v1286, 0
  %v1347 = vsel %vm503, %v1287, 0
  %v1350 = vsel %vm503, %v1288, 0
  %v1353 = vsel %vm503, %v1289, 0
  %v1356 = vsel %vm503, %v1290, 0
  %v1359 = vsel %vm503, %v1291, 0
  %v1362 = vsel %vm503, %v1292, 0
  %v1365 = vsel %vm503, %v1293, 0
  %1367 = vmatpush.msra.mxu0 0.0
  %1368 = vmatpush.msra.mxu0 0.0
  %1369 = vmatpush.msra.mxu0 0.0
  %1370 = vmatpush.msra.mxu0 0.0
  %1371 = vmatpush.msra.mxu0 0.0
  %1372 = vmatpush.msra.mxu0 0.0
  %1373 = vmatpush.msra.mxu0 0.0
  %1374 = vmatpush.msra.mxu0 0.0
  %1375 = vmatpush.msra.mxu0 0.0
  %1376 = vmatpush.msra.mxu0 0.0
  %1377 = vmatpush.msra.mxu0 %v1284
  %1378 = vmatpush.msra.mxu0 %v1283
  %1379 = vmatpush.msra.mxu0 %v1282
  %1380 = vmatpush.msra.mxu0 %v1281
  %1381 = vmatpush.msra.mxu0 %v1280
  %1382 = vmatpush.msra.mxu0 %v1279
  %1383 = vmatmul.f32.gmra.mxu0 %v1344
  %v1384 = vpop.f32.mrf.mxu0
  %v1385 = vadd.f32 %v1306, %v1384
  %1386 = vmatmul.f32.gmra.mxu0 %v1347
  %v1387 = vpop.f32.mrf.mxu0
  %v1388 = vadd.f32 %v1311, %v1387
  %1389 = vmatmul.f32.gmra.mxu0 %v1350
  %v1390 = vpop.f32.mrf.mxu0
  %v1391 = vadd.f32 %v1316, %v1390
  %1392 = vmatmul.f32.gmra.mxu0 %v1353
  %v1393 = vpop.f32.mrf.mxu0
  %v1394 = vadd.f32 %v1321, %v1393
  %1395 = vmatmul.f32.gmra.mxu0 %v1356
  %v1396 = vpop.f32.mrf.mxu0
  %v1397 = vadd.f32 %v1326, %v1396
  %1398 = vmatmul.f32.gmra.mxu0 %v1359
  %v1399 = vpop.f32.mrf.mxu0
  %v1400 = vadd.f32 %v1331, %v1399
  %1401 = vmatmul.f32.gmra.mxu0 %v1362
  %v1402 = vpop.f32.mrf.mxu0
  %v1403 = vadd.f32 %v1336, %v1402
  %1404 = vmatmul.f32.gmra.mxu0 %v1365
  %v1405 = vpop.f32.mrf.mxu0
  %v1406 = vadd.f32 %v1341, %v1405
  %1407 = vdwg.mxu0
  %v1408 = vmul.f32 %v1385, 0.01
  %v1409 = vmul.f32 %v1388, 0.01
  %v1410 = vmul.f32 %v1391, 0.01
  %v1411 = vmul.f32 %v1394, 0.01
  %v1412 = vmul.f32 %v1397, 0.01
  %v1413 = vmul.f32 %v1400, 0.01
  %v1414 = vmul.f32 %v1403, 0.01
  %v1415 = vmul.f32 %v1406, 0.01
  %v1416 = vmax.f32 %v1385, %v1408
  %v1417 = vmax.f32 %v1388, %v1409
  %v1418 = vmax.f32 %v1391, %v1410
  %v1419 = vmax.f32 %v1394, %v1411
  %v1420 = vmax.f32 %v1397, %v1412
  %v1421 = vmax.f32 %v1400, %v1413
  %v1422 = vmax.f32 %v1403, %v1414
  %v1423 = vmax.f32 %v1406, %v1415
  %s1424 = scalar_lea.vmem %s9, 48
  %v1425 = vld [vmem:[%s1424] sm:$0xff]
  %v1426 = vld [vmem:[%s1424 + $0x8] sm:$0xff]
  %v1427 = vld [vmem:[%s1424 + $0x10] sm:$0xff]
  %v1428 = vld [vmem:[%s1424 + $0x18] sm:$0xff]
  %v1429 = vld [vmem:[%s1424 + $0x20] sm:$0xff]
  %v1430 = vld [vmem:[%s1424 + $0x28] sm:$0xff]
  %s1431 = scalar_lea.vmem %s10, 48
  %v1432 = vld [vmem:[%s1431] sm:$0xff]
  %v1433 = vld [vmem:[%s1431 + $0x8] sm:$0xff]
  %v1434 = vld [vmem:[%s1431 + $0x10] sm:$0xff]
  %v1435 = vld [vmem:[%s1431 + $0x18] sm:$0xff]
  %v1436 = vld [vmem:[%s1431 + $0x20] sm:$0xff]
  %v1437 = vld [vmem:[%s1431 + $0x28] sm:$0xff]
  %1439 = vset.pattern.permute.xlu0 0
  %1440 = vperm.xlu0 %1439, %v1432
  %v1441 = vpop.permute.xlu0 %1440
  %1444 = vset.pattern.permute.xlu0 0
  %1445 = vperm.xlu0 %1444, %v1433
  %v1446 = vpop.permute.xlu0 %1445
  %1449 = vset.pattern.permute.xlu0 0
  %1450 = vperm.xlu0 %1449, %v1434
  %v1451 = vpop.permute.xlu0 %1450
  %1454 = vset.pattern.permute.xlu0 0
  %1455 = vperm.xlu0 %1454, %v1435
  %v1456 = vpop.permute.xlu0 %1455
  %1459 = vset.pattern.permute.xlu0 0
  %1460 = vperm.xlu0 %1459, %v1436
  %v1461 = vpop.permute.xlu0 %1460
  %1464 = vset.pattern.permute.xlu0 0
  %1465 = vperm.xlu0 %1464, %v1437
  %v1466 = vpop.permute.xlu0 %1465
  %v1469 = vsel %vm306, %v1425, 0
  %v1472 = vsel %vm306, %v1426, 0
  %v1475 = vsel %vm306, %v1427, 0
  %v1478 = vsel %vm306, %v1428, 0
  %v1481 = vsel %vm306, %v1429, 0
  %v1484 = vsel %vm306, %v1430, 0
  %v1487 = vsel %vm325, %v1423, 0
  %1489 = vmatpush.msra.mxu0 0.0
  %1490 = vmatpush.msra.mxu0 0.0
  %1491 = vmatpush.msra.mxu0 0.0
  %1492 = vmatpush.msra.mxu0 0.0
  %1493 = vmatpush.msra.mxu0 0.0
  %1494 = vmatpush.msra.mxu0 0.0
  %1495 = vmatpush.msra.mxu0 0.0
  %1496 = vmatpush.msra.mxu0 0.0
  %1497 = vmatpush.msra.mxu0 %v1487
  %1498 = vmatpush.msra.mxu0 %v1422
  %1499 = vmatpush.msra.mxu0 %v1421
  %1500 = vmatpush.msra.mxu0 %v1420
  %1501 = vmatpush.msra.mxu0 %v1419
  %1502 = vmatpush.msra.mxu0 %v1418
  %1503 = vmatpush.msra.mxu0 %v1417
  %1504 = vmatpush.msra.mxu0 %v1416
  %1505 = vmatmul.f32.gmra.mxu0 %v1469
  %v1506 = vpop.f32.mrf.mxu0
  %v1507 = vadd.f32 %v1441, %v1506
  %1508 = vmatmul.f32.gmra.mxu0 %v1472
  %v1509 = vpop.f32.mrf.mxu0
  %v1510 = vadd.f32 %v1446, %v1509
  %1511 = vmatmul.f32.gmra.mxu0 %v1475
  %v1512 = vpop.f32.mrf.mxu0
  %v1513 = vadd.f32 %v1451, %v1512
  %1514 = vmatmul.f32.gmra.mxu0 %v1478
  %v1515 = vpop.f32.mrf.mxu0
  %v1516 = vadd.f32 %v1456, %v1515
  %1517 = vmatmul.f32.gmra.mxu0 %v1481
  %v1518 = vpop.f32.mrf.mxu0
  %v1519 = vadd.f32 %v1461, %v1518
  %1520 = vmatmul.f32.gmra.mxu0 %v1484
  %v1521 = vpop.f32.mrf.mxu0
  %v1522 = vadd.f32 %v1466, %v1521
  %1523 = vdwg.mxu0
  %v1524 = vtanh.pop %v1507
  %v1525 = vtanh.pop %v1510
  %v1526 = vtanh.pop %v1513
  %v1527 = vtanh.pop %v1516
  %v1528 = vtanh.pop %v1519
  %v1529 = vtanh.pop %v1522
  %s1530 = scalar_lea.vmem %s11, 48
  %v1531 = vld [vmem:[%s1530] sm:$0xff]
  %v1532 = vld [vmem:[%s1530 + $0x8] sm:$0xff]
  %v1533 = vld [vmem:[%s1530 + $0x10] sm:$0xff]
  %v1534 = vld [vmem:[%s1530 + $0x18] sm:$0xff]
  %v1535 = vld [vmem:[%s1530 + $0x20] sm:$0xff]
  %v1536 = vld [vmem:[%s1530 + $0x28] sm:$0xff]
  %s1537 = scalar_lea.vmem %s12, 48
  %v1538 = vld [vmem:[%s1537] sm:$0xff]
  %v1539 = vld [vmem:[%s1537 + $0x8] sm:$0xff]
  %v1540 = vld [vmem:[%s1537 + $0x10] sm:$0xff]
  %v1541 = vld [vmem:[%s1537 + $0x18] sm:$0xff]
  %v1542 = vld [vmem:[%s1537 + $0x20] sm:$0xff]
  %v1543 = vld [vmem:[%s1537 + $0x28] sm:$0xff]
  %v1545 = vsel %vm503, %v1538, 0
  %v1548 = vsel %vm503, %v1539, 0
  %v1551 = vsel %vm503, %v1540, 0
  %v1554 = vsel %vm503, %v1541, 0
  %v1557 = vsel %vm503, %v1542, 0
  %v1560 = vsel %vm503, %v1543, 0
  %1562 = vmatpush.msra.mxu0 0.0
  %1563 = vmatpush.msra.mxu0 0.0
  %1564 = vmatpush.msra.mxu0 0.0
  %1565 = vmatpush.msra.mxu0 0.0
  %1566 = vmatpush.msra.mxu0 0.0
  %1567 = vmatpush.msra.mxu0 0.0
  %1568 = vmatpush.msra.mxu0 0.0
  %1569 = vmatpush.msra.mxu0 0.0
  %1570 = vmatpush.msra.mxu0 0.0
  %1571 = vmatpush.msra.mxu0 0.0
  %1572 = vmatpush.msra.mxu0 %v1529
  %1573 = vmatpush.msra.mxu0 %v1528
  %1574 = vmatpush.msra.mxu0 %v1527
  %1575 = vmatpush.msra.mxu0 %v1526
  %1576 = vmatpush.msra.mxu0 %v1525
  %1577 = vmatpush.msra.mxu0 %v1524
  %1578 = vmatmul.f32.gmra.mxu0 %v1545
  %v1579 = vpop.f32.mrf.mxu0
  %v1580 = vadd.f32 0.0, %v1579
  %1581 = vmatmul.f32.gmra.mxu0 %v1548
  %v1582 = vpop.f32.mrf.mxu0
  %v1583 = vadd.f32 0.0, %v1582
  %1584 = vmatmul.f32.gmra.mxu0 %v1551
  %v1585 = vpop.f32.mrf.mxu0
  %v1586 = vadd.f32 0.0, %v1585
  %1587 = vmatmul.f32.gmra.mxu0 %v1554
  %v1588 = vpop.f32.mrf.mxu0
  %v1589 = vadd.f32 0.0, %v1588
  %1590 = vmatmul.f32.gmra.mxu0 %v1557
  %v1591 = vpop.f32.mrf.mxu0
  %v1592 = vadd.f32 0.0, %v1591
  %1593 = vmatmul.f32.gmra.mxu0 %v1560
  %v1594 = vpop.f32.mrf.mxu0
  %v1595 = vadd.f32 0.0, %v1594
  %1596 = vdwg.mxu0
  %v1598 = vsel %vm503, %v1531, 0
  %v1601 = vsel %vm503, %v1532, 0
  %v1604 = vsel %vm503, %v1533, 0
  %v1607 = vsel %vm503, %v1534, 0
  %v1610 = vsel %vm503, %v1535, 0
  %v1613 = vsel %vm503, %v1536, 0
  %1615 = vmatpush.msra.mxu0 0.0
  %1616 = vmatpush.msra.mxu0 0.0
  %1617 = vmatpush.msra.mxu0 0.0
  %1618 = vmatpush.msra.mxu0 0.0
  %1619 = vmatpush.msra.mxu0 0.0
  %1620 = vmatpush.msra.mxu0 0.0
  %1621 = vmatpush.msra.mxu0 0.0
  %1622 = vmatpush.msra.mxu0 0.0
  %1623 = vmatpush.msra.mxu0 0.0
  %1624 = vmatpush.msra.mxu0 0.0
  %1625 = vmatpush.msra.mxu0 %v1284
  %1626 = vmatpush.msra.mxu0 %v1283
  %1627 = vmatpush.msra.mxu0 %v1282
  %1628 = vmatpush.msra.mxu0 %v1281
  %1629 = vmatpush.msra.mxu0 %v1280
  %1630 = vmatpush.msra.mxu0 %v1279
  %1631 = vmatmul.f32.gmra.mxu0 %v1598
  %v1632 = vpop.f32.mrf.mxu0
  %v1633 = vadd.f32 %v1580, %v1632
  %1634 = vmatmul.f32.gmra.mxu0 %v1601
  %v1635 = vpop.f32.mrf.mxu0
  %v1636 = vadd.f32 %v1583, %v1635
  %1637 = vmatmul.f32.gmra.mxu0 %v1604
  %v1638 = vpop.f32.mrf.mxu0
  %v1639 = vadd.f32 %v1586, %v1638
  %1640 = vmatmul.f32.gmra.mxu0 %v1607
  %v1641 = vpop.f32.mrf.mxu0
  %v1642 = vadd.f32 %v1589, %v1641
  %1643 = vmatmul.f32.gmra.mxu0 %v1610
  %v1644 = vpop.f32.mrf.mxu0
  %v1645 = vadd.f32 %v1592, %v1644
  %1646 = vmatmul.f32.gmra.mxu0 %v1613
  %v1647 = vpop.f32.mrf.mxu0
  %v1648 = vadd.f32 %v1595, %v1647
  %1649 = vdwg.mxu0
  %s1650 = scalar_lea.vmem %s14, 72
  %v1651 = vld [vmem:[%s1650] sm:$0xff]
  %v1652 = vld [vmem:[%s1650 + $0x8] sm:$0xff]
  %v1653 = vld [vmem:[%s1650 + $0x10] sm:$0xff]
  %v1654 = vld [vmem:[%s1650 + $0x18] sm:$0xff]
  %v1655 = vld [vmem:[%s1650 + $0x20] sm:$0xff]
  %v1656 = vld [vmem:[%s1650 + $0x28] sm:$0xff]
  %v1657 = vld [vmem:[%s1650 + $0x30] sm:$0xff]
  %v1658 = vld [vmem:[%s1650 + $0x38] sm:$0xff]
  %v1659 = vld [vmem:[%s1650 + $0x40] sm:$0x3]
  %1661 = vset.pattern.permute.xlu0 0
  %1662 = vperm.xlu0 %1661, %v1651
  %v1663 = vpop.permute.xlu0 %1662
  %1666 = vset.pattern.permute.xlu0 0
  %1667 = vperm.xlu0 %1666, %v1652
  %v1668 = vpop.permute.xlu0 %1667
  %1671 = vset.pattern.permute.xlu0 0
  %1672 = vperm.xlu0 %1671, %v1653
  %v1673 = vpop.permute.xlu0 %1672
  %1676 = vset.pattern.permute.xlu0 0
  %1677 = vperm.xlu0 %1676, %v1654
  %v1678 = vpop.permute.xlu0 %1677
  %1681 = vset.pattern.permute.xlu0 0
  %1682 = vperm.xlu0 %1681, %v1655
  %v1683 = vpop.permute.xlu0 %1682
  %1686 = vset.pattern.permute.xlu0 0
  %1687 = vperm.xlu0 %1686, %v1656
  %v1688 = vpop.permute.xlu0 %1687
  %1691 = vset.pattern.permute.xlu0 0
  %1692 = vperm.xlu0 %1691, %v1657
  %v1693 = vpop.permute.xlu0 %1692
  %1696 = vset.pattern.permute.xlu0 0
  %1697 = vperm.xlu0 %1696, %v1658
  %v1698 = vpop.permute.xlu0 %1697
  %1701 = vset.pattern.permute.xlu0 0
  %1702 = vperm.xlu0 %1701, %v1659
  %v1703 = vpop.permute.xlu0 %1702
  %v1705 = vmul.f32 %v950, %v1663
  %v1706 = vmul.f32 %v951, %v1668
  %v1707 = vmul.f32 %v952, %v1673
  %v1708 = vmul.f32 %v953, %v1678
  %v1709 = vmul.f32 %v954, %v1683
  %v1710 = vmul.f32 %v955, %v1688
  %v1711 = vmul.f32 %v956, %v1693
  %v1712 = vmul.f32 %v957, %v1698
  %v1713 = vmul.f32 %v958, %v1703
  %s1714 = scalar_lea.vmem %s13, 72
  %v1715 = vld [vmem:[%s1714] sm:$0xff]
  %v1716 = vld [vmem:[%s1714 + $0x8] sm:$0xff]
  %v1717 = vld [vmem:[%s1714 + $0x10] sm:$0xff]
  %v1718 = vld [vmem:[%s1714 + $0x18] sm:$0xff]
  %v1719 = vld [vmem:[%s1714 + $0x20] sm:$0xff]
  %v1720 = vld [vmem:[%s1714 + $0x28] sm:$0xff]
  %v1721 = vld [vmem:[%s1714 + $0x30] sm:$0xff]
  %v1722 = vld [vmem:[%s1714 + $0x38] sm:$0xff]
  %v1723 = vld [vmem:[%s1714 + $0x40] sm:$0x3]
  %v1725 = vsel %vm503, %v1715, 0
  %v1728 = vsel %vm503, %v1716, 0
  %v1731 = vsel %vm503, %v1717, 0
  %v1734 = vsel %vm503, %v1718, 0
  %v1737 = vsel %vm503, %v1719, 0
  %v1740 = vsel %vm503, %v1720, 0
  %v1743 = vsel %vm503, %v1721, 0
  %v1746 = vsel %vm503, %v1722, 0
  %v1749 = vsel %vm503, %v1723, 0
  %1751 = vmatpush.msra.mxu0 0.0
  %1752 = vmatpush.msra.mxu0 0.0
  %1753 = vmatpush.msra.mxu0 0.0
  %1754 = vmatpush.msra.mxu0 0.0
  %1755 = vmatpush.msra.mxu0 0.0
  %1756 = vmatpush.msra.mxu0 0.0
  %1757 = vmatpush.msra.mxu0 0.0
  %1758 = vmatpush.msra.mxu0 0.0
  %1759 = vmatpush.msra.mxu0 0.0
  %1760 = vmatpush.msra.mxu0 0.0
  %1761 = vmatpush.msra.mxu0 %v1648
  %1762 = vmatpush.msra.mxu0 %v1645
  %1763 = vmatpush.msra.mxu0 %v1642
  %1764 = vmatpush.msra.mxu0 %v1639
  %1765 = vmatpush.msra.mxu0 %v1636
  %1766 = vmatpush.msra.mxu0 %v1633
  %1767 = vmatmul.f32.gmra.mxu0 %v1725
  %v1768 = vpop.f32.mrf.mxu0
  %v1769 = vadd.f32 0.0, %v1768
  %1770 = vmatmul.f32.gmra.mxu0 %v1728
  %v1771 = vpop.f32.mrf.mxu0
  %v1772 = vadd.f32 0.0, %v1771
  %1773 = vmatmul.f32.gmra.mxu0 %v1731
  %v1774 = vpop.f32.mrf.mxu0
  %v1775 = vadd.f32 0.0, %v1774
  %1776 = vmatmul.f32.gmra.mxu0 %v1734
  %v1777 = vpop.f32.mrf.mxu0
  %v1778 = vadd.f32 0.0, %v1777
  %1779 = vmatmul.f32.gmra.mxu0 %v1737
  %v1780 = vpop.f32.mrf.mxu0
  %v1781 = vadd.f32 0.0, %v1780
  %1782 = vmatmul.f32.gmra.mxu0 %v1740
  %v1783 = vpop.f32.mrf.mxu0
  %v1784 = vadd.f32 0.0, %v1783
  %1785 = vmatmul.f32.gmra.mxu0 %v1743
  %v1786 = vpop.f32.mrf.mxu0
  %v1787 = vadd.f32 0.0, %v1786
  %1788 = vmatmul.f32.gmra.mxu0 %v1746
  %v1789 = vpop.f32.mrf.mxu0
  %v1790 = vadd.f32 0.0, %v1789
  %1791 = vmatmul.f32.gmra.mxu0 %v1749
  %v1792 = vpop.f32.mrf.mxu0
  %v1793 = vadd.f32 0.0, %v1792
  %1794 = vdwg.mxu0
  %v1795 = vadd.f32 %v1705, %v1769
  %v1796 = vadd.f32 %v1706, %v1772
  %v1797 = vadd.f32 %v1707, %v1775
  %v1798 = vadd.f32 %v1708, %v1778
  %v1799 = vadd.f32 %v1709, %v1781
  %v1800 = vadd.f32 %v1710, %v1784
  %v1801 = vadd.f32 %v1711, %v1787
  %v1802 = vadd.f32 %v1712, %v1790
  %v1803 = vadd.f32 %v1713, %v1793
  %1804 = vst [vmem:[%s15] sm:$0xff] %v1795
  %1805 = vst [vmem:[%s15 + $0x8] sm:$0xff] %v1796
  %1806 = vst [vmem:[%s15 + $0x10] sm:$0xff] %v1797
  %1807 = vst [vmem:[%s15 + $0x18] sm:$0xff] %v1798
  %1808 = vst [vmem:[%s15 + $0x20] sm:$0xff] %v1799
  %1809 = vst [vmem:[%s15 + $0x28] sm:$0xff] %v1800
  %1810 = vst [vmem:[%s15 + $0x30] sm:$0xff] %v1801
  %1811 = vst [vmem:[%s15 + $0x38] sm:$0xff] %v1802
  %1812 = vst [vmem:[%s15 + $0x40] sm:$0x3] %v1803
  // Predicated region
  $region62: #{scinet_body_forward.1} parent=0 // pred_check
    _
  $region63: #{scinet_body_forward.1} parent=0 // pred_check_branch
    %1814 = sbr.rel (0) target = $region65
  $region64: #{scinet_body_forward.1} parent=0 // pred_region
    _
  $region65: #{scinet_body_forward.1} parent=0 // pred_fallthru
    _
  // Predicated region
  $region66: #{scinet_body_forward.1} parent=0 // pred_check
    _
  $region67: #{scinet_body_forward.1} parent=0 // pred_check_branch
    %1816 = sbr.rel (0) target = $region69
  $region68: #{scinet_body_forward.1} parent=0 // pred_region
    _
  $region69: #{scinet_body_forward.1} parent=0 // pred_fallthru
    _

</llo_original>
